<compile_context>
chip_gen: v7x
topology: tpu7x:2x2x1
jax: 0.10.0
libtpu: 0.0.40
codegen_flags: <defaults>
</compile_context>

<pallas_src>
import math

import jax
import jax.numpy as jnp
import numpy as np
from jax.experimental import pallas as pl
from jax.experimental.pallas import tpu as pltpu

F32 = jnp.float32
LN_EPS = 1e-5
LANE = 128
# Set to jnp.bfloat16 on v6e/v7x for ~2x MXU throughput (accumulation stays f32).
MXU_DTYPE = jnp.float32


def _round_up(v, m):
    return (v + m - 1) // m * m


def _make_kernel(*, num_heads, head_dim, out_dim, edge_tile, num_edges):
    H, D = num_heads, head_dim
    HD = H * D
    TE = edge_tile
    inv_sqrt_d = 1.0 / math.sqrt(D)
    inv_od = 1.0 / out_dim
    unroll = TE <= 16

    def mm(a, b):
        return jnp.dot(a.astype(MXU_DTYPE), b.astype(MXU_DTYPE),
                       preferred_element_type=F32)

    def kernel(src_ref, dst_ref,                                  # scalar prefetch (SMEM)
               x_ref, ea_ref, cnt_ref,
               wq_ref, bq_ref, wk_ref, bk_ref, wv_ref, bv_ref,
               we_ref, be_ref, wo_ref, bo_ref,
               g1_ref, beta1_ref, w1_ref, bf1_ref, w2_ref, bf2_ref,
               g2_ref, beta2_ref,
               out_ref,
               q_s, k_s, v_s, acc_s, qs_s, kd_s, vd_s, oute_s):
        t = pl.program_id(0)
        base = t * TE

        # --- step 0: node projections (stay VMEM-resident across edge tiles) ---
        @pl.when(t == 0)
        def _init():
            x = x_ref[...]
            q_s[...] = mm(x, wq_ref[...]) + bq_ref[...]
            k_s[...] = mm(x, wk_ref[...]) + bk_ref[...]
            v_s[...] = mm(x, wv_ref[...]) + bv_ref[...]
            acc_s[...] = jnp.zeros_like(acc_s)

        # --- edge-feature projection for this edge tile (MXU) ---
        ep = mm(ea_ref[...], we_ref[...]) + be_ref[...]            # [TE, HDp]

        # --- index gather of Q[src], K[dst], V[dst] (O(E*HD)) ---
        def gather_body(e, carry):
            s = src_ref[base + e]
            d = dst_ref[base + e]
            qs_s[pl.ds(e, 1), :] = q_s[pl.ds(s, 1), :]
            kd_s[pl.ds(e, 1), :] = k_s[pl.ds(d, 1), :]
            vd_s[pl.ds(e, 1), :] = v_s[pl.ds(d, 1), :]
            return carry

        jax.lax.fori_loop(0, TE, gather_body, 0, unroll=unroll)

        # --- per-head scores on VPU/XLU (no tiny-K MXU matmuls) ---
        prod = qs_s[...] * kd_s[...] + ep * ep                     # [TE, HDp]
        scores = jnp.concatenate(
            [jnp.sum(prod[:, h * D:(h + 1) * D], axis=-1, keepdims=True)
             for h in range(H)], axis=-1) * inv_sqrt_d             # [TE, H]

        # softmax over heads
        m = jnp.max(scores, axis=-1, keepdims=True)
        e_sc = jnp.exp(scores - m)
        alpha = e_sc * pl.reciprocal(jnp.sum(e_sc, axis=-1, keepdims=True),
                                     approx=True)                  # [TE, H]

        # alpha-weighted V[dst], heads concatenated (lane broadcast on VPU)
        vd = vd_s[...]
        weighted = jnp.concatenate(
            [alpha[:, h:h + 1] * vd[:, h * D:(h + 1) * D] for h in range(H)],
            axis=-1)                                               # [TE, HD]

        out_e = mm(weighted, wo_ref[...]) + bo_ref[...]            # [TE, ODp]

        # mask padded edges of the last tile (they point at node 0, add zeros)
        eidx = base + jax.lax.broadcasted_iota(jnp.int32, (TE, 1), 0)
        oute_s[...] = jnp.where(eidx < num_edges, out_e, 0.0)

        # --- segment accumulation (scatter-add) into the node accumulator ---
        def scatter_body(e, carry):
            s = src_ref[base + e]
            acc_s[pl.ds(s, 1), :] = (acc_s[pl.ds(s, 1), :]
                                     + oute_s[pl.ds(e, 1), :])
            return carry

        jax.lax.fori_loop(0, TE, scatter_body, 0, unroll=unroll)

        # --- last edge tile: mean, LN1, FFN, LN2, lane-dense store ---
        @pl.when(t == pl.num_programs(0) - 1)
        def _finalize():
            cnt = jnp.maximum(cnt_ref[...], 1.0)                   # [Np, 1]
            h = acc_s[...] / cnt                                   # [Np, ODp]

            # LayerNorm 1 (padded lanes are exactly 0, so sum-based stats are exact)
            mu = jnp.sum(h, axis=-1, keepdims=True) * inv_od
            var = jnp.sum(h * h, axis=-1, keepdims=True) * inv_od - mu * mu
            hln = ((h - mu) * jax.lax.rsqrt(var + LN_EPS)
                   * g1_ref[...] + beta1_ref[...])

            # FFN: Linear -> ReLU -> (Dropout=identity) -> Linear
            f = jnp.maximum(mm(hln, w1_ref[...]) + bf1_ref[...], 0.0)
            f = mm(f, w2_ref[...]) + bf2_ref[...]

            # LayerNorm 2
            mu2 = jnp.sum(f, axis=-1, keepdims=True) * inv_od
            var2 = jnp.sum(f * f, axis=-1, keepdims=True) * inv_od - mu2 * mu2
            out_ref[...] = ((f - mu2) * jax.lax.rsqrt(var2 + LN_EPS)
                            * g2_ref[...] + beta2_ref[...])

    return kernel


def init_params(key, in_dim, out_dim, edge_dim, num_heads):
    """Deterministic synthetic parameters (shapes match the PyTorch module)."""
    HD = out_dim * num_heads
    ks = jax.random.split(key, 12)

    def lin(k, fan_in, fan_out):
        kw, kb = jax.random.split(k)
        w = jax.random.normal(kw, (fan_in, fan_out), F32) * 0.1
        b = jax.random.normal(kb, (1, fan_out), F32) * 0.1
        return w, b

    wq, bq = lin(ks[0], in_dim, HD)
    wk, bk = lin(ks[1], in_dim, HD)
    wv, bv = lin(ks[2], in_dim, HD)
    we, be = lin(ks[3], edge_dim, HD)
    wo, bo = lin(ks[4], HD, out_dim)
    w1, bf1 = lin(ks[5], out_dim, out_dim * 2)
    w2, bf2 = lin(ks[6], out_dim * 2, out_dim)
    g1 = jnp.ones((1, out_dim), F32)
    beta1 = jnp.zeros((1, out_dim), F32)
    g2 = jnp.ones((1, out_dim), F32)
    beta2 = jnp.zeros((1, out_dim), F32)
    return dict(wq=wq, bq=bq, wk=wk, bk=bk, wv=wv, bv=bv, we=we, be=be,
                wo=wo, bo=bo, g1=g1, beta1=beta1, w1=w1, bf1=bf1,
                w2=w2, bf2=bf2, g2=g2, beta2=beta2)


def graph_transformer_layer(x, edge_index, edge_attr, params, num_heads,
                            out_dim, *, edge_tile=8):
    """Wrapper: zero-pads to lane-dense shapes, builds scalar-prefetch index
    arrays, and calls the fused Pallas kernel. Output: [N, out_dim] float32."""
    if edge_attr.ndim == 1:
        edge_attr = edge_attr[:, None]
    x = x.astype(F32)
    edge_attr = edge_attr.astype(F32)

    N, in_dim = x.shape
    E, edge_dim = edge_attr.shape
    H, D = num_heads, out_dim
    HD = H * D

    Np = _round_up(N, 8)
    HDp = _round_up(HD, LANE)
    ODp = _round_up(out_dim, LANE)
    FHp = _round_up(out_dim * 2, LANE)
    TE = edge_tile
    Ep = _round_up(E, TE)
    n_tiles = Ep // TE

    def pad2(a, r, c):
        a = a.astype(F32)
        return jnp.pad(a, ((0, r - a.shape[0]), (0, c - a.shape[1])))

    p = params
    wq, bq = pad2(p["wq"], in_dim, HDp), pad2(p["bq"], 1, HDp)
    wk, bk = pad2(p["wk"], in_dim, HDp), pad2(p["bk"], 1, HDp)
    wv, bv = pad2(p["wv"], in_dim, HDp), pad2(p["bv"], 1, HDp)
    we, be = pad2(p["we"], edge_dim, HDp), pad2(p["be"], 1, HDp)
    wo, bo = pad2(p["wo"], HD, ODp), pad2(p["bo"], 1, ODp)
    g1, beta1 = pad2(p["g1"], 1, ODp), pad2(p["beta1"], 1, ODp)
    w1, bf1 = pad2(p["w1"], ODp, FHp), pad2(p["bf1"], 1, FHp)
    w2, bf2 = pad2(p["w2"], FHp, ODp), pad2(p["bf2"], 1, ODp)
    g2, beta2 = pad2(p["g2"], 1, ODp), pad2(p["beta2"], 1, ODp)

    xp = pad2(x, Np, in_dim)
    eap = pad2(edge_attr, Ep, edge_dim)

    src = edge_index[0].astype(jnp.int32)
    dst = edge_index[1].astype(jnp.int32)
    src_p = jnp.pad(src, (0, Ep - E))            # padded edges -> node 0, masked
    dst_p = jnp.pad(dst, (0, Ep - E))
    counts = jnp.zeros((Np,), F32).at[src].add(1.0).reshape(Np, 1)

    kernel = _make_kernel(num_heads=H, head_dim=D, out_dim=out_dim,
                          edge_tile=TE, num_edges=E)

    def full(shape):
        return pl.BlockSpec(shape, lambda t, *prefetch: (0, 0))

    in_specs = [
        full(xp.shape),                                            # x
        pl.BlockSpec((TE, edge_dim), lambda t, *prefetch: (t, 0)),  # edge_attr
        full(counts.shape),                                        # counts
        full(wq.shape), full(bq.shape), full(wk.shape), full(bk.shape),
        full(wv.shape), full(bv.shape), full(we.shape), full(be.shape),
        full(wo.shape), full(bo.shape),
        full(g1.shape), full(beta1.shape),
        full(w1.shape), full(bf1.shape), full(w2.shape), full(bf2.shape),
        full(g2.shape), full(beta2.shape),
    ]

    grid_spec = pltpu.PrefetchScalarGridSpec(
        num_scalar_prefetch=2,
        grid=(n_tiles,),
        in_specs=in_specs,
        out_specs=pl.BlockSpec((Np, ODp), lambda t, *prefetch: (0, 0)),
        scratch_shapes=[
            pltpu.VMEM((Np, HDp), F32),    # q
            pltpu.VMEM((Np, HDp), F32),    # k
            pltpu.VMEM((Np, HDp), F32),    # v
            pltpu.VMEM((Np, ODp), F32),    # node accumulator
            pltpu.VMEM((TE, HDp), F32),    # gathered Q[src]
            pltpu.VMEM((TE, HDp), F32),    # gathered K[dst]
            pltpu.VMEM((TE, HDp), F32),    # gathered V[dst]
            pltpu.VMEM((TE, ODp), F32),    # per-tile edge output
        ],
    )

    flops = int(2.0 * (3 * Np * in_dim * HDp + Ep * edge_dim * HDp
                       + Ep * HD * ODp + 2 * Np * ODp * FHp)
                + 10.0 * Ep * HDp)
    transcendentals = int(Ep * H + 2 * Np)
    bytes_accessed = int(sum(a.size * a.dtype.itemsize for a in
                             (xp, eap, wq, wk, wv, we, wo, w1, w2))
                         + Np * ODp * 4)

    out = pl.pallas_call(
        kernel,
        grid_spec=grid_spec,
        out_shape=jax.ShapeDtypeStruct((Np, ODp), F32),
        compiler_params=pltpu.CompilerParams(
            dimension_semantics=("arbitrary",),   # edge axis is a reduction
            vmem_limit_bytes=32 * 1024 * 1024),
        cost_estimate=pl.CostEstimate(flops=flops,
                                      transcendentals=transcendentals,
                                      bytes_accessed=bytes_accessed),
    )(src_p, dst_p, xp, eap, counts, wq, bq, wk, bk, wv, bv, we, be, wo, bo,
      g1, beta1, w1, bf1, w2, bf2, g2, beta2)

    return out[:N, :out_dim]


def reference(x, edge_index, edge_attr, params, num_heads, out_dim):
    """Pure-JAX reference mirroring the PyTorch forward (eval mode)."""
    if edge_attr.ndim == 1:
        edge_attr = edge_attr[:, None]
    H, D = num_heads, out_dim
    N = x.shape[0]
    p = params
    Q = (x @ p["wq"] + p["bq"]).reshape(-1, H, D)
    K = (x @ p["wk"] + p["bk"]).reshape(-1, H, D)
    V = (x @ p["wv"] + p["bv"]).reshape(-1, H, D)
    Ef = (edge_attr @ p["we"] + p["be"]).reshape(-1, H, D)
    src, dst = edge_index[0], edge_index[1]
    scores = (jnp.einsum("bhd,bhd->bh", Q[src], K[dst]) +
              jnp.einsum("bhd,bhd->bh", Ef, Ef)) / np.sqrt(D)
    alpha = jax.nn.softmax(scores, axis=-1)
    out = jnp.einsum("bh,bhd->bhd", alpha, V[dst]).reshape(-1, H * D)
    out = out @ p["wo"] + p["bo"]
    summed = jnp.zeros((N, out_dim), F32).at[src].add(out)
    cnt = jnp.zeros((N,), F32).at[src].add(1.0)
    h = summed / jnp.maximum(cnt, 1.0)[:, None]

    def ln(v, g, b):
        mu = jnp.mean(v, axis=-1, keepdims=True)
        var = jnp.mean((v - mu) ** 2, axis=-1, keepdims=True)
        return (v - mu) * jax.lax.rsqrt(var + LN_EPS) * g + b

    h = ln(h, p["g1"], p["beta1"])
    f = jnp.maximum(h @ p["w1"] + p["bf1"], 0.0) @ p["w2"] + p["bf2"]
    return ln(f, p["g2"], p["beta2"])


if __name__ == "__main__":
    # Small shapes consistent with the module.
    N, E = 8, 16
    in_dim, out_dim, edge_dim, num_heads = 16, 8, 4, 4

    key = jax.random.PRNGKey(0)
    kx, ke, kp = jax.random.split(key, 3)

    x = jax.random.normal(kx, (N, in_dim), F32)
    edge_attr = jax.random.normal(ke, (E, edge_dim), F32)
    # Every node appears at least once as a source so scatter-mean covers [0, N).
    src = jnp.arange(E, dtype=jnp.int32) % N
    dst = (jnp.arange(E, dtype=jnp.int32) * 3 + 1) % N
    edge_index = jnp.stack([src, dst], axis=0)

    params = init_params(kp, in_dim, out_dim, edge_dim, num_heads)

    out = graph_transformer_layer(x, edge_index, edge_attr, params,
                                  num_heads, out_dim, edge_tile=8)
    out = jax.block_until_ready(out)

    ref = reference(x, edge_index, edge_attr, params, num_heads, out_dim)
    np.testing.assert_allclose(np.asarray(out), np.asarray(ref),
                               rtol=1e-2, atol=1e-2)
    print("KERNEL_OK")
</pallas_src>

<mosaic_0001>
module attributes {stable_mosaic.version = 11 : i64} {
  func.func @kernel(%arg0: i32, %arg1: memref<16xi32, #tpu.memory_space<smem>>, %arg2: memref<16xi32, #tpu.memory_space<smem>>, %arg3: memref<8x16xf32, #tpu.memory_space<vmem>>, %arg4: memref<8x4xf32, #tpu.memory_space<vmem>>, %arg5: memref<8x1xf32, #tpu.memory_space<vmem>>, %arg6: memref<16x128xf32, #tpu.memory_space<vmem>>, %arg7: memref<1x128xf32, #tpu.memory_space<vmem>>, %arg8: memref<16x128xf32, #tpu.memory_space<vmem>>, %arg9: memref<1x128xf32, #tpu.memory_space<vmem>>, %arg10: memref<16x128xf32, #tpu.memory_space<vmem>>, %arg11: memref<1x128xf32, #tpu.memory_space<vmem>>, %arg12: memref<4x128xf32, #tpu.memory_space<vmem>>, %arg13: memref<1x128xf32, #tpu.memory_space<vmem>>, %arg14: memref<32x128xf32, #tpu.memory_space<vmem>>, %arg15: memref<1x128xf32, #tpu.memory_space<vmem>>, %arg16: memref<1x128xf32, #tpu.memory_space<vmem>>, %arg17: memref<1x128xf32, #tpu.memory_space<vmem>>, %arg18: memref<128x128xf32, #tpu.memory_space<vmem>>, %arg19: memref<1x128xf32, #tpu.memory_space<vmem>>, %arg20: memref<128x128xf32, #tpu.memory_space<vmem>>, %arg21: memref<1x128xf32, #tpu.memory_space<vmem>>, %arg22: memref<1x128xf32, #tpu.memory_space<vmem>>, %arg23: memref<1x128xf32, #tpu.memory_space<vmem>>, %arg24: memref<8x128xf32, #tpu.memory_space<vmem>>, %arg25: memref<8x128xf32, #tpu.memory_space<vmem>>, %arg26: memref<8x128xf32, #tpu.memory_space<vmem>>, %arg27: memref<8x128xf32, #tpu.memory_space<vmem>>, %arg28: memref<8x128xf32, #tpu.memory_space<vmem>>, %arg29: memref<8x128xf32, #tpu.memory_space<vmem>>, %arg30: memref<8x128xf32, #tpu.memory_space<vmem>>, %arg31: memref<8x128xf32, #tpu.memory_space<vmem>>, %arg32: memref<8x128xf32, #tpu.memory_space<vmem>>) attributes {dimension_semantics = [#tpu.dimension_semantics<arbitrary>], iteration_bounds = array<i64: 2>, scalar_prefetch = 2 : i64, scratch_operands = 8 : i64, tpu.core_type = #tpu.core_type<tc>, window_params = [{pipeline_mode = #tpu.pipeline_mode<synchronous>, transform_indices = @transform_0, window_bounds = array<i64: 8, 16>}, {transform_indices = @transform_1, window_bounds = array<i64: 8, 4>}, {pipeline_mode = #tpu.pipeline_mode<synchronous>, transform_indices = @transform_2, window_bounds = array<i64: 8, 1>}, {pipeline_mode = #tpu.pipeline_mode<synchronous>, transform_indices = @transform_3, window_bounds = array<i64: 16, 128>}, {pipeline_mode = #tpu.pipeline_mode<synchronous>, transform_indices = @transform_4, window_bounds = array<i64: 1, 128>}, {pipeline_mode = #tpu.pipeline_mode<synchronous>, transform_indices = @transform_5, window_bounds = array<i64: 16, 128>}, {pipeline_mode = #tpu.pipeline_mode<synchronous>, transform_indices = @transform_6, window_bounds = array<i64: 1, 128>}, {pipeline_mode = #tpu.pipeline_mode<synchronous>, transform_indices = @transform_7, window_bounds = array<i64: 16, 128>}, {pipeline_mode = #tpu.pipeline_mode<synchronous>, transform_indices = @transform_8, window_bounds = array<i64: 1, 128>}, {pipeline_mode = #tpu.pipeline_mode<synchronous>, transform_indices = @transform_9, window_bounds = array<i64: 4, 128>}, {pipeline_mode = #tpu.pipeline_mode<synchronous>, transform_indices = @transform_10, window_bounds = array<i64: 1, 128>}, {pipeline_mode = #tpu.pipeline_mode<synchronous>, transform_indices = @transform_11, window_bounds = array<i64: 32, 128>}, {pipeline_mode = #tpu.pipeline_mode<synchronous>, transform_indices = @transform_12, window_bounds = array<i64: 1, 128>}, {pipeline_mode = #tpu.pipeline_mode<synchronous>, transform_indices = @transform_13, window_bounds = array<i64: 1, 128>}, {pipeline_mode = #tpu.pipeline_mode<synchronous>, transform_indices = @transform_14, window_bounds = array<i64: 1, 128>}, {pipeline_mode = #tpu.pipeline_mode<synchronous>, transform_indices = @transform_15, window_bounds = array<i64: 128, 128>}, {pipeline_mode = #tpu.pipeline_mode<synchronous>, transform_indices = @transform_16, window_bounds = array<i64: 1, 128>}, {pipeline_mode = #tpu.pipeline_mode<synchronous>, transform_indices = @transform_17, window_bounds = array<i64: 128, 128>}, {pipeline_mode = #tpu.pipeline_mode<synchronous>, transform_indices = @transform_18, window_bounds = array<i64: 1, 128>}, {pipeline_mode = #tpu.pipeline_mode<synchronous>, transform_indices = @transform_19, window_bounds = array<i64: 1, 128>}, {pipeline_mode = #tpu.pipeline_mode<synchronous>, transform_indices = @transform_20, window_bounds = array<i64: 1, 128>}, {pipeline_mode = #tpu.pipeline_mode<synchronous>, transform_indices = @transform_21, window_bounds = array<i64: 8, 128>}]} {
    %c8_i32 = arith.constant 8 : i32
    %0 = arith.muli %arg0, %c8_i32 : i32
    %c0_i32 = arith.constant 0 : i32
    %1 = arith.cmpi eq, %arg0, %c0_i32 : i32
    %2 = arith.extui %1 : i1 to i32
    %c0_i32_0 = arith.constant 0 : i32
    %3 = arith.cmpi ne, %2, %c0_i32_0 : i32
    scf.if %3 {
      %c0_112 = arith.constant 0 : index
      %c0_113 = arith.constant 0 : index
      %300 = vector.load %arg3[%c0_112, %c0_113] : memref<8x16xf32, #tpu.memory_space<vmem>>, vector<8x16xf32>
      %c0_114 = arith.constant 0 : index
      %c0_115 = arith.constant 0 : index
      %301 = vector.load %arg6[%c0_114, %c0_115] : memref<16x128xf32, #tpu.memory_space<vmem>>, vector<16x128xf32>
      %cst_116 = arith.constant dense<0.000000e+00> : vector<8x128xf32>
      %302 = tpu.matmul %300, %301, %cst_116 {dimension_numbers = #tpu.dot_dimension_numbers<[1], [0], [0], [1], [0, 0, 1, 1], [], []>} : vector<8x16xf32>, vector<16x128xf32>, vector<8x128xf32> -> vector<8x128xf32>
      %c0_117 = arith.constant 0 : index
      %c0_118 = arith.constant 0 : index
      %303 = vector.load %arg7[%c0_117, %c0_118] : memref<1x128xf32, #tpu.memory_space<vmem>>, vector<1x128xf32>
      %304 = vector.broadcast %303 : vector<1x128xf32> to vector<8x128xf32>
      %305 = arith.addf %302, %304 : vector<8x128xf32>
      %c0_119 = arith.constant 0 : index
      %c0_120 = arith.constant 0 : index
      %306 = vector.load %arg25[%c0_119, %c0_120] : memref<8x128xf32, #tpu.memory_space<vmem>>, vector<8x128xf32>
      tpu.vector_store %arg25[%c0_119, %c0_120], %305 {strides = array<i32>} : memref<8x128xf32, #tpu.memory_space<vmem>>, vector<8x128xf32>,
      %c0_121 = arith.constant 0 : index
      %c0_122 = arith.constant 0 : index
      %307 = vector.load %arg8[%c0_121, %c0_122] : memref<16x128xf32, #tpu.memory_space<vmem>>, vector<16x128xf32>
      %cst_123 = arith.constant dense<0.000000e+00> : vector<8x128xf32>
      %308 = tpu.matmul %300, %307, %cst_123 {dimension_numbers = #tpu.dot_dimension_numbers<[1], [0], [0], [1], [0, 0, 1, 1], [], []>} : vector<8x16xf32>, vector<16x128xf32>, vector<8x128xf32> -> vector<8x128xf32>
      %c0_124 = arith.constant 0 : index
      %c0_125 = arith.constant 0 : index
      %309 = vector.load %arg9[%c0_124, %c0_125] : memref<1x128xf32, #tpu.memory_space<vmem>>, vector<1x128xf32>
      %310 = vector.broadcast %309 : vector<1x128xf32> to vector<8x128xf32>
      %311 = arith.addf %308, %310 : vector<8x128xf32>
      %c0_126 = arith.constant 0 : index
      %c0_127 = arith.constant 0 : index
      %312 = vector.load %arg26[%c0_126, %c0_127] : memref<8x128xf32, #tpu.memory_space<vmem>>, vector<8x128xf32>
      tpu.vector_store %arg26[%c0_126, %c0_127], %311 {strides = array<i32>} : memref<8x128xf32, #tpu.memory_space<vmem>>, vector<8x128xf32>,
      %c0_128 = arith.constant 0 : index
      %c0_129 = arith.constant 0 : index
      %313 = vector.load %arg10[%c0_128, %c0_129] : memref<16x128xf32, #tpu.memory_space<vmem>>, vector<16x128xf32>
      %cst_130 = arith.constant dense<0.000000e+00> : vector<8x128xf32>
      %314 = tpu.matmul %300, %313, %cst_130 {dimension_numbers = #tpu.dot_dimension_numbers<[1], [0], [0], [1], [0, 0, 1, 1], [], []>} : vector<8x16xf32>, vector<16x128xf32>, vector<8x128xf32> -> vector<8x128xf32>
      %c0_131 = arith.constant 0 : index
      %c0_132 = arith.constant 0 : index
      %315 = vector.load %arg11[%c0_131, %c0_132] : memref<1x128xf32, #tpu.memory_space<vmem>>, vector<1x128xf32>
      %316 = vector.broadcast %315 : vector<1x128xf32> to vector<8x128xf32>
      %317 = arith.addf %314, %316 : vector<8x128xf32>
      %c0_133 = arith.constant 0 : index
      %c0_134 = arith.constant 0 : index
      %318 = vector.load %arg27[%c0_133, %c0_134] : memref<8x128xf32, #tpu.memory_space<vmem>>, vector<8x128xf32>
      tpu.vector_store %arg27[%c0_133, %c0_134], %317 {strides = array<i32>} : memref<8x128xf32, #tpu.memory_space<vmem>>, vector<8x128xf32>,
      %cst_135 = arith.constant 0.000000e+00 : f32
      %319 = vector.broadcast %cst_135 : f32 to vector<8x128xf32>
      %c0_136 = arith.constant 0 : index
      %c0_137 = arith.constant 0 : index
      %320 = vector.load %arg28[%c0_136, %c0_137] : memref<8x128xf32, #tpu.memory_space<vmem>>, vector<8x128xf32>
      tpu.vector_store %arg28[%c0_136, %c0_137], %319 {strides = array<i32>} : memref<8x128xf32, #tpu.memory_space<vmem>>, vector<8x128xf32>,
    } else {
    }
    %c0 = arith.constant 0 : index
    %c0_1 = arith.constant 0 : index
    %4 = vector.load %arg4[%c0, %c0_1] : memref<8x4xf32, #tpu.memory_space<vmem>>, vector<8x4xf32>
    %c0_2 = arith.constant 0 : index
    %c0_3 = arith.constant 0 : index
    %5 = vector.load %arg12[%c0_2, %c0_3] : memref<4x128xf32, #tpu.memory_space<vmem>>, vector<4x128xf32>
    %cst = arith.constant dense<0.000000e+00> : vector<8x128xf32>
    %6 = tpu.matmul %4, %5, %cst {dimension_numbers = #tpu.dot_dimension_numbers<[1], [0], [0], [1], [0, 0, 1, 1], [], []>} : vector<8x4xf32>, vector<4x128xf32>, vector<8x128xf32> -> vector<8x128xf32>
    %c0_4 = arith.constant 0 : index
    %c0_5 = arith.constant 0 : index
    %7 = vector.load %arg13[%c0_4, %c0_5] : memref<1x128xf32, #tpu.memory_space<vmem>>, vector<1x128xf32>
    %8 = vector.broadcast %7 : vector<1x128xf32> to vector<8x128xf32>
    %9 = arith.addf %6, %8 : vector<8x128xf32>
    %c0_i32_6 = arith.constant 0 : i32
    %10 = arith.addi %0, %c0_i32_6 : i32
    %11 = arith.index_cast %10 : i32 to index
    %12 = memref.load %arg1[%11] : memref<16xi32, #tpu.memory_space<smem>>
    %13 = arith.addi %0, %c0_i32_6 : i32
    %14 = arith.index_cast %13 : i32 to index
    %15 = memref.load %arg2[%14] : memref<16xi32, #tpu.memory_space<smem>>
    %16 = arith.index_cast %12 : i32 to index
    %c0_7 = arith.constant 0 : index
    %17 = vector.load %arg25[%16, %c0_7] : memref<8x128xf32, #tpu.memory_space<vmem>>, vector<1x128xf32>
    %18 = arith.index_cast %c0_i32_6 : i32 to index
    %c0_8 = arith.constant 0 : index
    %19 = vector.load %arg29[%18, %c0_8] : memref<8x128xf32, #tpu.memory_space<vmem>>, vector<1x128xf32>
    tpu.vector_store %arg29[%18, %c0_8], %17 {strides = array<i32>} : memref<8x128xf32, #tpu.memory_space<vmem>>, vector<1x128xf32>,
    %20 = arith.index_cast %15 : i32 to index
    %c0_9 = arith.constant 0 : index
    %21 = vector.load %arg26[%20, %c0_9] : memref<8x128xf32, #tpu.memory_space<vmem>>, vector<1x128xf32>
    %22 = arith.index_cast %c0_i32_6 : i32 to index
    %c0_10 = arith.constant 0 : index
    %23 = vector.load %arg30[%22, %c0_10] : memref<8x128xf32, #tpu.memory_space<vmem>>, vector<1x128xf32>
    tpu.vector_store %arg30[%22, %c0_10], %21 {strides = array<i32>} : memref<8x128xf32, #tpu.memory_space<vmem>>, vector<1x128xf32>,
    %24 = arith.index_cast %15 : i32 to index
    %c0_11 = arith.constant 0 : index
    %25 = vector.load %arg27[%24, %c0_11] : memref<8x128xf32, #tpu.memory_space<vmem>>, vector<1x128xf32>
    %26 = arith.index_cast %c0_i32_6 : i32 to index
    %c0_12 = arith.constant 0 : index
    %27 = vector.load %arg31[%26, %c0_12] : memref<8x128xf32, #tpu.memory_space<vmem>>, vector<1x128xf32>
    tpu.vector_store %arg31[%26, %c0_12], %25 {strides = array<i32>} : memref<8x128xf32, #tpu.memory_space<vmem>>, vector<1x128xf32>,
    %c1_i32 = arith.constant 1 : i32
    %28 = arith.addi %0, %c1_i32 : i32
    %29 = arith.index_cast %28 : i32 to index
    %30 = memref.load %arg1[%29] : memref<16xi32, #tpu.memory_space<smem>>
    %31 = arith.addi %0, %c1_i32 : i32
    %32 = arith.index_cast %31 : i32 to index
    %33 = memref.load %arg2[%32] : memref<16xi32, #tpu.memory_space<smem>>
    %34 = arith.index_cast %30 : i32 to index
    %c0_13 = arith.constant 0 : index
    %35 = vector.load %arg25[%34, %c0_13] : memref<8x128xf32, #tpu.memory_space<vmem>>, vector<1x128xf32>
    %36 = arith.index_cast %c1_i32 : i32 to index
    %c0_14 = arith.constant 0 : index
    %37 = vector.load %arg29[%36, %c0_14] : memref<8x128xf32, #tpu.memory_space<vmem>>, vector<1x128xf32>
    tpu.vector_store %arg29[%36, %c0_14], %35 {strides = array<i32>} : memref<8x128xf32, #tpu.memory_space<vmem>>, vector<1x128xf32>,
    %38 = arith.index_cast %33 : i32 to index
    %c0_15 = arith.constant 0 : index
    %39 = vector.load %arg26[%38, %c0_15] : memref<8x128xf32, #tpu.memory_space<vmem>>, vector<1x128xf32>
    %40 = arith.index_cast %c1_i32 : i32 to index
    %c0_16 = arith.constant 0 : index
    %41 = vector.load %arg30[%40, %c0_16] : memref<8x128xf32, #tpu.memory_space<vmem>>, vector<1x128xf32>
    tpu.vector_store %arg30[%40, %c0_16], %39 {strides = array<i32>} : memref<8x128xf32, #tpu.memory_space<vmem>>, vector<1x128xf32>,
    %42 = arith.index_cast %33 : i32 to index
    %c0_17 = arith.constant 0 : index
    %43 = vector.load %arg27[%42, %c0_17] : memref<8x128xf32, #tpu.memory_space<vmem>>, vector<1x128xf32>
    %44 = arith.index_cast %c1_i32 : i32 to index
    %c0_18 = arith.constant 0 : index
    %45 = vector.load %arg31[%44, %c0_18] : memref<8x128xf32, #tpu.memory_space<vmem>>, vector<1x128xf32>
    tpu.vector_store %arg31[%44, %c0_18], %43 {strides = array<i32>} : memref<8x128xf32, #tpu.memory_space<vmem>>, vector<1x128xf32>,
    %c2_i32 = arith.constant 2 : i32
    %46 = arith.addi %0, %c2_i32 : i32
    %47 = arith.index_cast %46 : i32 to index
    %48 = memref.load %arg1[%47] : memref<16xi32, #tpu.memory_space<smem>>
    %49 = arith.addi %0, %c2_i32 : i32
    %50 = arith.index_cast %49 : i32 to index
    %51 = memref.load %arg2[%50] : memref<16xi32, #tpu.memory_space<smem>>
    %52 = arith.index_cast %48 : i32 to index
    %c0_19 = arith.constant 0 : index
    %53 = vector.load %arg25[%52, %c0_19] : memref<8x128xf32, #tpu.memory_space<vmem>>, vector<1x128xf32>
    %54 = arith.index_cast %c2_i32 : i32 to index
    %c0_20 = arith.constant 0 : index
    %55 = vector.load %arg29[%54, %c0_20] : memref<8x128xf32, #tpu.memory_space<vmem>>, vector<1x128xf32>
    tpu.vector_store %arg29[%54, %c0_20], %53 {strides = array<i32>} : memref<8x128xf32, #tpu.memory_space<vmem>>, vector<1x128xf32>,
    %56 = arith.index_cast %51 : i32 to index
    %c0_21 = arith.constant 0 : index
    %57 = vector.load %arg26[%56, %c0_21] : memref<8x128xf32, #tpu.memory_space<vmem>>, vector<1x128xf32>
    %58 = arith.index_cast %c2_i32 : i32 to index
    %c0_22 = arith.constant 0 : index
    %59 = vector.load %arg30[%58, %c0_22] : memref<8x128xf32, #tpu.memory_space<vmem>>, vector<1x128xf32>
    tpu.vector_store %arg30[%58, %c0_22], %57 {strides = array<i32>} : memref<8x128xf32, #tpu.memory_space<vmem>>, vector<1x128xf32>,
    %60 = arith.index_cast %51 : i32 to index
    %c0_23 = arith.constant 0 : index
    %61 = vector.load %arg27[%60, %c0_23] : memref<8x128xf32, #tpu.memory_space<vmem>>, vector<1x128xf32>
    %62 = arith.index_cast %c2_i32 : i32 to index
    %c0_24 = arith.constant 0 : index
    %63 = vector.load %arg31[%62, %c0_24] : memref<8x128xf32, #tpu.memory_space<vmem>>, vector<1x128xf32>
    tpu.vector_store %arg31[%62, %c0_24], %61 {strides = array<i32>} : memref<8x128xf32, #tpu.memory_space<vmem>>, vector<1x128xf32>,
    %c3_i32 = arith.constant 3 : i32
    %64 = arith.addi %0, %c3_i32 : i32
    %65 = arith.index_cast %64 : i32 to index
    %66 = memref.load %arg1[%65] : memref<16xi32, #tpu.memory_space<smem>>
    %67 = arith.addi %0, %c3_i32 : i32
    %68 = arith.index_cast %67 : i32 to index
    %69 = memref.load %arg2[%68] : memref<16xi32, #tpu.memory_space<smem>>
    %70 = arith.index_cast %66 : i32 to index
    %c0_25 = arith.constant 0 : index
    %71 = vector.load %arg25[%70, %c0_25] : memref<8x128xf32, #tpu.memory_space<vmem>>, vector<1x128xf32>
    %72 = arith.index_cast %c3_i32 : i32 to index
    %c0_26 = arith.constant 0 : index
    %73 = vector.load %arg29[%72, %c0_26] : memref<8x128xf32, #tpu.memory_space<vmem>>, vector<1x128xf32>
    tpu.vector_store %arg29[%72, %c0_26], %71 {strides = array<i32>} : memref<8x128xf32, #tpu.memory_space<vmem>>, vector<1x128xf32>,
    %74 = arith.index_cast %69 : i32 to index
    %c0_27 = arith.constant 0 : index
    %75 = vector.load %arg26[%74, %c0_27] : memref<8x128xf32, #tpu.memory_space<vmem>>, vector<1x128xf32>
    %76 = arith.index_cast %c3_i32 : i32 to index
    %c0_28 = arith.constant 0 : index
    %77 = vector.load %arg30[%76, %c0_28] : memref<8x128xf32, #tpu.memory_space<vmem>>, vector<1x128xf32>
    tpu.vector_store %arg30[%76, %c0_28], %75 {strides = array<i32>} : memref<8x128xf32, #tpu.memory_space<vmem>>, vector<1x128xf32>,
    %78 = arith.index_cast %69 : i32 to index
    %c0_29 = arith.constant 0 : index
    %79 = vector.load %arg27[%78, %c0_29] : memref<8x128xf32, #tpu.memory_space<vmem>>, vector<1x128xf32>
    %80 = arith.index_cast %c3_i32 : i32 to index
    %c0_30 = arith.constant 0 : index
    %81 = vector.load %arg31[%80, %c0_30] : memref<8x128xf32, #tpu.memory_space<vmem>>, vector<1x128xf32>
    tpu.vector_store %arg31[%80, %c0_30], %79 {strides = array<i32>} : memref<8x128xf32, #tpu.memory_space<vmem>>, vector<1x128xf32>,
    %c4_i32 = arith.constant 4 : i32
    %82 = arith.addi %0, %c4_i32 : i32
    %83 = arith.index_cast %82 : i32 to index
    %84 = memref.load %arg1[%83] : memref<16xi32, #tpu.memory_space<smem>>
    %85 = arith.addi %0, %c4_i32 : i32
    %86 = arith.index_cast %85 : i32 to index
    %87 = memref.load %arg2[%86] : memref<16xi32, #tpu.memory_space<smem>>
    %88 = arith.index_cast %84 : i32 to index
    %c0_31 = arith.constant 0 : index
    %89 = vector.load %arg25[%88, %c0_31] : memref<8x128xf32, #tpu.memory_space<vmem>>, vector<1x128xf32>
    %90 = arith.index_cast %c4_i32 : i32 to index
    %c0_32 = arith.constant 0 : index
    %91 = vector.load %arg29[%90, %c0_32] : memref<8x128xf32, #tpu.memory_space<vmem>>, vector<1x128xf32>
    tpu.vector_store %arg29[%90, %c0_32], %89 {strides = array<i32>} : memref<8x128xf32, #tpu.memory_space<vmem>>, vector<1x128xf32>,
    %92 = arith.index_cast %87 : i32 to index
    %c0_33 = arith.constant 0 : index
    %93 = vector.load %arg26[%92, %c0_33] : memref<8x128xf32, #tpu.memory_space<vmem>>, vector<1x128xf32>
    %94 = arith.index_cast %c4_i32 : i32 to index
    %c0_34 = arith.constant 0 : index
    %95 = vector.load %arg30[%94, %c0_34] : memref<8x128xf32, #tpu.memory_space<vmem>>, vector<1x128xf32>
    tpu.vector_store %arg30[%94, %c0_34], %93 {strides = array<i32>} : memref<8x128xf32, #tpu.memory_space<vmem>>, vector<1x128xf32>,
    %96 = arith.index_cast %87 : i32 to index
    %c0_35 = arith.constant 0 : index
    %97 = vector.load %arg27[%96, %c0_35] : memref<8x128xf32, #tpu.memory_space<vmem>>, vector<1x128xf32>
    %98 = arith.index_cast %c4_i32 : i32 to index
    %c0_36 = arith.constant 0 : index
    %99 = vector.load %arg31[%98, %c0_36] : memref<8x128xf32, #tpu.memory_space<vmem>>, vector<1x128xf32>
    tpu.vector_store %arg31[%98, %c0_36], %97 {strides = array<i32>} : memref<8x128xf32, #tpu.memory_space<vmem>>, vector<1x128xf32>,
    %c5_i32 = arith.constant 5 : i32
    %100 = arith.addi %0, %c5_i32 : i32
    %101 = arith.index_cast %100 : i32 to index
    %102 = memref.load %arg1[%101] : memref<16xi32, #tpu.memory_space<smem>>
    %103 = arith.addi %0, %c5_i32 : i32
    %104 = arith.index_cast %103 : i32 to index
    %105 = memref.load %arg2[%104] : memref<16xi32, #tpu.memory_space<smem>>
    %106 = arith.index_cast %102 : i32 to index
    %c0_37 = arith.constant 0 : index
    %107 = vector.load %arg25[%106, %c0_37] : memref<8x128xf32, #tpu.memory_space<vmem>>, vector<1x128xf32>
    %108 = arith.index_cast %c5_i32 : i32 to index
    %c0_38 = arith.constant 0 : index
    %109 = vector.load %arg29[%108, %c0_38] : memref<8x128xf32, #tpu.memory_space<vmem>>, vector<1x128xf32>
    tpu.vector_store %arg29[%108, %c0_38], %107 {strides = array<i32>} : memref<8x128xf32, #tpu.memory_space<vmem>>, vector<1x128xf32>,
    %110 = arith.index_cast %105 : i32 to index
    %c0_39 = arith.constant 0 : index
    %111 = vector.load %arg26[%110, %c0_39] : memref<8x128xf32, #tpu.memory_space<vmem>>, vector<1x128xf32>
    %112 = arith.index_cast %c5_i32 : i32 to index
    %c0_40 = arith.constant 0 : index
    %113 = vector.load %arg30[%112, %c0_40] : memref<8x128xf32, #tpu.memory_space<vmem>>, vector<1x128xf32>
    tpu.vector_store %arg30[%112, %c0_40], %111 {strides = array<i32>} : memref<8x128xf32, #tpu.memory_space<vmem>>, vector<1x128xf32>,
    %114 = arith.index_cast %105 : i32 to index
    %c0_41 = arith.constant 0 : index
    %115 = vector.load %arg27[%114, %c0_41] : memref<8x128xf32, #tpu.memory_space<vmem>>, vector<1x128xf32>
    %116 = arith.index_cast %c5_i32 : i32 to index
    %c0_42 = arith.constant 0 : index
    %117 = vector.load %arg31[%116, %c0_42] : memref<8x128xf32, #tpu.memory_space<vmem>>, vector<1x128xf32>
    tpu.vector_store %arg31[%116, %c0_42], %115 {strides = array<i32>} : memref<8x128xf32, #tpu.memory_space<vmem>>, vector<1x128xf32>,
    %c6_i32 = arith.constant 6 : i32
    %118 = arith.addi %0, %c6_i32 : i32
    %119 = arith.index_cast %118 : i32 to index
    %120 = memref.load %arg1[%119] : memref<16xi32, #tpu.memory_space<smem>>
    %121 = arith.addi %0, %c6_i32 : i32
    %122 = arith.index_cast %121 : i32 to index
    %123 = memref.load %arg2[%122] : memref<16xi32, #tpu.memory_space<smem>>
    %124 = arith.index_cast %120 : i32 to index
    %c0_43 = arith.constant 0 : index
    %125 = vector.load %arg25[%124, %c0_43] : memref<8x128xf32, #tpu.memory_space<vmem>>, vector<1x128xf32>
    %126 = arith.index_cast %c6_i32 : i32 to index
    %c0_44 = arith.constant 0 : index
    %127 = vector.load %arg29[%126, %c0_44] : memref<8x128xf32, #tpu.memory_space<vmem>>, vector<1x128xf32>
    tpu.vector_store %arg29[%126, %c0_44], %125 {strides = array<i32>} : memref<8x128xf32, #tpu.memory_space<vmem>>, vector<1x128xf32>,
    %128 = arith.index_cast %123 : i32 to index
    %c0_45 = arith.constant 0 : index
    %129 = vector.load %arg26[%128, %c0_45] : memref<8x128xf32, #tpu.memory_space<vmem>>, vector<1x128xf32>
    %130 = arith.index_cast %c6_i32 : i32 to index
    %c0_46 = arith.constant 0 : index
    %131 = vector.load %arg30[%130, %c0_46] : memref<8x128xf32, #tpu.memory_space<vmem>>, vector<1x128xf32>
    tpu.vector_store %arg30[%130, %c0_46], %129 {strides = array<i32>} : memref<8x128xf32, #tpu.memory_space<vmem>>, vector<1x128xf32>,
    %132 = arith.index_cast %123 : i32 to index
    %c0_47 = arith.constant 0 : index
    %133 = vector.load %arg27[%132, %c0_47] : memref<8x128xf32, #tpu.memory_space<vmem>>, vector<1x128xf32>
    %134 = arith.index_cast %c6_i32 : i32 to index
    %c0_48 = arith.constant 0 : index
    %135 = vector.load %arg31[%134, %c0_48] : memref<8x128xf32, #tpu.memory_space<vmem>>, vector<1x128xf32>
    tpu.vector_store %arg31[%134, %c0_48], %133 {strides = array<i32>} : memref<8x128xf32, #tpu.memory_space<vmem>>, vector<1x128xf32>,
    %c7_i32 = arith.constant 7 : i32
    %136 = arith.addi %0, %c7_i32 : i32
    %137 = arith.index_cast %136 : i32 to index
    %138 = memref.load %arg1[%137] : memref<16xi32, #tpu.memory_space<smem>>
    %139 = arith.addi %0, %c7_i32 : i32
    %140 = arith.index_cast %139 : i32 to index
    %141 = memref.load %arg2[%140] : memref<16xi32, #tpu.memory_space<smem>>
    %142 = arith.index_cast %138 : i32 to index
    %c0_49 = arith.constant 0 : index
    %143 = vector.load %arg25[%142, %c0_49] : memref<8x128xf32, #tpu.memory_space<vmem>>, vector<1x128xf32>
    %144 = arith.index_cast %c7_i32 : i32 to index
    %c0_50 = arith.constant 0 : index
    %145 = vector.load %arg29[%144, %c0_50] : memref<8x128xf32, #tpu.memory_space<vmem>>, vector<1x128xf32>
    tpu.vector_store %arg29[%144, %c0_50], %143 {strides = array<i32>} : memref<8x128xf32, #tpu.memory_space<vmem>>, vector<1x128xf32>,
    %146 = arith.index_cast %141 : i32 to index
    %c0_51 = arith.constant 0 : index
    %147 = vector.load %arg26[%146, %c0_51] : memref<8x128xf32, #tpu.memory_space<vmem>>, vector<1x128xf32>
    %148 = arith.index_cast %c7_i32 : i32 to index
    %c0_52 = arith.constant 0 : index
    %149 = vector.load %arg30[%148, %c0_52] : memref<8x128xf32, #tpu.memory_space<vmem>>, vector<1x128xf32>
    tpu.vector_store %arg30[%148, %c0_52], %147 {strides = array<i32>} : memref<8x128xf32, #tpu.memory_space<vmem>>, vector<1x128xf32>,
    %150 = arith.index_cast %141 : i32 to index
    %c0_53 = arith.constant 0 : index
    %151 = vector.load %arg27[%150, %c0_53] : memref<8x128xf32, #tpu.memory_space<vmem>>, vector<1x128xf32>
    %152 = arith.index_cast %c7_i32 : i32 to index
    %c0_54 = arith.constant 0 : index
    %153 = vector.load %arg31[%152, %c0_54] : memref<8x128xf32, #tpu.memory_space<vmem>>, vector<1x128xf32>
    tpu.vector_store %arg31[%152, %c0_54], %151 {strides = array<i32>} : memref<8x128xf32, #tpu.memory_space<vmem>>, vector<1x128xf32>,
    %c8_i32_55 = arith.constant 8 : i32
    %c0_56 = arith.constant 0 : index
    %c0_57 = arith.constant 0 : index
    %154 = vector.load %arg29[%c0_56, %c0_57] : memref<8x128xf32, #tpu.memory_space<vmem>>, vector<8x128xf32>
    %c0_58 = arith.constant 0 : index
    %c0_59 = arith.constant 0 : index
    %155 = vector.load %arg30[%c0_58, %c0_59] : memref<8x128xf32, #tpu.memory_space<vmem>>, vector<8x128xf32>
    %156 = arith.mulf %154, %155 : vector<8x128xf32>
    %157 = arith.mulf %9, %9 : vector<8x128xf32>
    %158 = arith.addf %156, %157 : vector<8x128xf32>
    %159 = vector.extract_strided_slice %158 {offsets = [0, 0], sizes = [8, 8], strides = [1, 1]} : vector<8x128xf32> to vector<8x8xf32>
    %cst_60 = arith.constant dense<0.000000e+00> : vector<8xf32>
    %160 = vector.multi_reduction <add>, %159, %cst_60 [1] : vector<8x8xf32> to vector<8xf32>
    %161 = vector.shape_cast %160 : vector<8xf32> to vector<8x1xf32>
    %162 = vector.extract_strided_slice %158 {offsets = [0, 8], sizes = [8, 8], strides = [1, 1]} : vector<8x128xf32> to vector<8x8xf32>
    %cst_61 = arith.constant dense<0.000000e+00> : vector<8xf32>
    %163 = vector.multi_reduction <add>, %162, %cst_61 [1] : vector<8x8xf32> to vector<8xf32>
    %164 = vector.shape_cast %163 : vector<8xf32> to vector<8x1xf32>
    %165 = vector.extract_strided_slice %158 {offsets = [0, 16], sizes = [8, 8], strides = [1, 1]} : vector<8x128xf32> to vector<8x8xf32>
    %cst_62 = arith.constant dense<0.000000e+00> : vector<8xf32>
    %166 = vector.multi_reduction <add>, %165, %cst_62 [1] : vector<8x8xf32> to vector<8xf32>
    %167 = vector.shape_cast %166 : vector<8xf32> to vector<8x1xf32>
    %168 = vector.extract_strided_slice %158 {offsets = [0, 24], sizes = [8, 8], strides = [1, 1]} : vector<8x128xf32> to vector<8x8xf32>
    %cst_63 = arith.constant dense<0.000000e+00> : vector<8xf32>
    %169 = vector.multi_reduction <add>, %168, %cst_63 [1] : vector<8x8xf32> to vector<8xf32>
    %170 = vector.shape_cast %169 : vector<8xf32> to vector<8x1xf32>
    %171 = tpu.concatenate %161, %164, %167, %170 in 1 : vector<8x1xf32>, vector<8x1xf32>, vector<8x1xf32>, vector<8x1xf32> -> vector<8x4xf32>
    %cst_64 = arith.constant 0.353553385 : f32
    %172 = vector.broadcast %cst_64 : f32 to vector<8x4xf32>
    %173 = arith.mulf %171, %172 : vector<8x4xf32>
    %cst_65 = arith.constant dense<0xFF800000> : vector<8xf32>
    %174 = vector.multi_reduction <maximumf>, %173, %cst_65 [1] : vector<8x4xf32> to vector<8xf32>
    %175 = vector.shape_cast %174 : vector<8xf32> to vector<8x1xf32>
    %176 = vector.broadcast %175 : vector<8x1xf32> to vector<8x4xf32>
    %177 = arith.subf %173, %176 : vector<8x4xf32>
    %178 = math.exp %177 : vector<8x4xf32>
    %cst_66 = arith.constant dense<0.000000e+00> : vector<8xf32>
    %179 = vector.multi_reduction <add>, %178, %cst_66 [1] : vector<8x4xf32> to vector<8xf32>
    %180 = vector.shape_cast %179 : vector<8xf32> to vector<8x1xf32>
    %181 = tpu.reciprocal %180 {approx = true} : vector<8x1xf32> -> vector<8x1xf32>
    %182 = vector.broadcast %181 : vector<8x1xf32> to vector<8x4xf32>
    %183 = arith.mulf %178, %182 : vector<8x4xf32>
    %c0_67 = arith.constant 0 : index
    %c0_68 = arith.constant 0 : index
    %184 = vector.load %arg31[%c0_67, %c0_68] : memref<8x128xf32, #tpu.memory_space<vmem>>, vector<8x128xf32>
    %185 = vector.extract_strided_slice %183 {offsets = [0, 0], sizes = [8, 1], strides = [1, 1]} : vector<8x4xf32> to vector<8x1xf32>
    %186 = vector.extract_strided_slice %184 {offsets = [0, 0], sizes = [8, 8], strides = [1, 1]} : vector<8x128xf32> to vector<8x8xf32>
    %187 = vector.broadcast %185 : vector<8x1xf32> to vector<8x8xf32>
    %188 = arith.mulf %187, %186 : vector<8x8xf32>
    %189 = vector.extract_strided_slice %183 {offsets = [0, 1], sizes = [8, 1], strides = [1, 1]} : vector<8x4xf32> to vector<8x1xf32>
    %190 = vector.extract_strided_slice %184 {offsets = [0, 8], sizes = [8, 8], strides = [1, 1]} : vector<8x128xf32> to vector<8x8xf32>
    %191 = vector.broadcast %189 : vector<8x1xf32> to vector<8x8xf32>
    %192 = arith.mulf %191, %190 : vector<8x8xf32>
    %193 = vector.extract_strided_slice %183 {offsets = [0, 2], sizes = [8, 1], strides = [1, 1]} : vector<8x4xf32> to vector<8x1xf32>
    %194 = vector.extract_strided_slice %184 {offsets = [0, 16], sizes = [8, 8], strides = [1, 1]} : vector<8x128xf32> to vector<8x8xf32>
    %195 = vector.broadcast %193 : vector<8x1xf32> to vector<8x8xf32>
    %196 = arith.mulf %195, %194 : vector<8x8xf32>
    %197 = vector.extract_strided_slice %183 {offsets = [0, 3], sizes = [8, 1], strides = [1, 1]} : vector<8x4xf32> to vector<8x1xf32>
    %198 = vector.extract_strided_slice %184 {offsets = [0, 24], sizes = [8, 8], strides = [1, 1]} : vector<8x128xf32> to vector<8x8xf32>
    %199 = vector.broadcast %197 : vector<8x1xf32> to vector<8x8xf32>
    %200 = arith.mulf %199, %198 : vector<8x8xf32>
    %201 = tpu.concatenate %188, %192, %196, %200 in 1 : vector<8x8xf32>, vector<8x8xf32>, vector<8x8xf32>, vector<8x8xf32> -> vector<8x32xf32>
    %c0_69 = arith.constant 0 : index
    %c0_70 = arith.constant 0 : index
    %202 = vector.load %arg14[%c0_69, %c0_70] : memref<32x128xf32, #tpu.memory_space<vmem>>, vector<32x128xf32>
    %cst_71 = arith.constant dense<0.000000e+00> : vector<8x128xf32>
    %203 = tpu.matmul %201, %202, %cst_71 {dimension_numbers = #tpu.dot_dimension_numbers<[1], [0], [0], [1], [0, 0, 1, 1], [], []>} : vector<8x32xf32>, vector<32x128xf32>, vector<8x128xf32> -> vector<8x128xf32>
    %c0_72 = arith.constant 0 : index
    %c0_73 = arith.constant 0 : index
    %204 = vector.load %arg15[%c0_72, %c0_73] : memref<1x128xf32, #tpu.memory_space<vmem>>, vector<1x128xf32>
    %205 = vector.broadcast %204 : vector<1x128xf32> to vector<8x128xf32>
    %206 = arith.addf %203, %205 : vector<8x128xf32>
    %207 = tpu.iota {dimensions = array<i32: 0>} : vector<8x1xi32>
    %208 = vector.broadcast %0 : i32 to vector<8x1xi32>
    %209 = arith.addi %208, %207 : vector<8x1xi32>
    %c16_i32 = arith.constant 16 : i32
    %210 = vector.broadcast %c16_i32 : i32 to vector<8x1xi32>
    %211 = arith.cmpi slt, %209, %210 : vector<8x1xi32>
    %cst_74 = arith.constant 0.000000e+00 : f32
    %212 = vector.shape_cast %211 : vector<8x1xi1> to vector<8x1xi1>
    %213 = vector.broadcast %212 : vector<8x1xi1> to vector<8x128xi1>
    %214 = vector.broadcast %cst_74 : f32 to vector<8x128xf32>
    %215 = arith.select %213, %206, %214 : vector<8x128xi1>, vector<8x128xf32>
    %c0_75 = arith.constant 0 : index
    %c0_76 = arith.constant 0 : index
    %216 = vector.load %arg32[%c0_75, %c0_76] : memref<8x128xf32, #tpu.memory_space<vmem>>, vector<8x128xf32>
    tpu.vector_store %arg32[%c0_75, %c0_76], %215 {strides = array<i32>} : memref<8x128xf32, #tpu.memory_space<vmem>>, vector<8x128xf32>,
    %c0_i32_77 = arith.constant 0 : i32
    %217 = arith.addi %0, %c0_i32_77 : i32
    %218 = arith.index_cast %217 : i32 to index
    %219 = memref.load %arg1[%218] : memref<16xi32, #tpu.memory_space<smem>>
    %220 = arith.index_cast %219 : i32 to index
    %c0_78 = arith.constant 0 : index
    %221 = vector.load %arg28[%220, %c0_78] : memref<8x128xf32, #tpu.memory_space<vmem>>, vector<1x128xf32>
    %222 = arith.index_cast %c0_i32_77 : i32 to index
    %c0_79 = arith.constant 0 : index
    %223 = vector.load %arg32[%222, %c0_79] : memref<8x128xf32, #tpu.memory_space<vmem>>, vector<1x128xf32>
    %224 = arith.addf %221, %223 : vector<1x128xf32>
    %225 = arith.index_cast %219 : i32 to index
    %c0_80 = arith.constant 0 : index
    %226 = vector.load %arg28[%225, %c0_80] : memref<8x128xf32, #tpu.memory_space<vmem>>, vector<1x128xf32>
    tpu.vector_store %arg28[%225, %c0_80], %224 {strides = array<i32>} : memref<8x128xf32, #tpu.memory_space<vmem>>, vector<1x128xf32>,
    %c1_i32_81 = arith.constant 1 : i32
    %227 = arith.addi %0, %c1_i32_81 : i32
    %228 = arith.index_cast %227 : i32 to index
    %229 = memref.load %arg1[%228] : memref<16xi32, #tpu.memory_space<smem>>
    %230 = arith.index_cast %229 : i32 to index
    %c0_82 = arith.constant 0 : index
    %231 = vector.load %arg28[%230, %c0_82] : memref<8x128xf32, #tpu.memory_space<vmem>>, vector<1x128xf32>
    %232 = arith.index_cast %c1_i32_81 : i32 to index
    %c0_83 = arith.constant 0 : index
    %233 = vector.load %arg32[%232, %c0_83] : memref<8x128xf32, #tpu.memory_space<vmem>>, vector<1x128xf32>
    %234 = arith.addf %231, %233 : vector<1x128xf32>
    %235 = arith.index_cast %229 : i32 to index
    %c0_84 = arith.constant 0 : index
    %236 = vector.load %arg28[%235, %c0_84] : memref<8x128xf32, #tpu.memory_space<vmem>>, vector<1x128xf32>
    tpu.vector_store %arg28[%235, %c0_84], %234 {strides = array<i32>} : memref<8x128xf32, #tpu.memory_space<vmem>>, vector<1x128xf32>,
    %c2_i32_85 = arith.constant 2 : i32
    %237 = arith.addi %0, %c2_i32_85 : i32
    %238 = arith.index_cast %237 : i32 to index
    %239 = memref.load %arg1[%238] : memref<16xi32, #tpu.memory_space<smem>>
    %240 = arith.index_cast %239 : i32 to index
    %c0_86 = arith.constant 0 : index
    %241 = vector.load %arg28[%240, %c0_86] : memref<8x128xf32, #tpu.memory_space<vmem>>, vector<1x128xf32>
    %242 = arith.index_cast %c2_i32_85 : i32 to index
    %c0_87 = arith.constant 0 : index
    %243 = vector.load %arg32[%242, %c0_87] : memref<8x128xf32, #tpu.memory_space<vmem>>, vector<1x128xf32>
    %244 = arith.addf %241, %243 : vector<1x128xf32>
    %245 = arith.index_cast %239 : i32 to index
    %c0_88 = arith.constant 0 : index
    %246 = vector.load %arg28[%245, %c0_88] : memref<8x128xf32, #tpu.memory_space<vmem>>, vector<1x128xf32>
    tpu.vector_store %arg28[%245, %c0_88], %244 {strides = array<i32>} : memref<8x128xf32, #tpu.memory_space<vmem>>, vector<1x128xf32>,
    %c3_i32_89 = arith.constant 3 : i32
    %247 = arith.addi %0, %c3_i32_89 : i32
    %248 = arith.index_cast %247 : i32 to index
    %249 = memref.load %arg1[%248] : memref<16xi32, #tpu.memory_space<smem>>
    %250 = arith.index_cast %249 : i32 to index
    %c0_90 = arith.constant 0 : index
    %251 = vector.load %arg28[%250, %c0_90] : memref<8x128xf32, #tpu.memory_space<vmem>>, vector<1x128xf32>
    %252 = arith.index_cast %c3_i32_89 : i32 to index
    %c0_91 = arith.constant 0 : index
    %253 = vector.load %arg32[%252, %c0_91] : memref<8x128xf32, #tpu.memory_space<vmem>>, vector<1x128xf32>
    %254 = arith.addf %251, %253 : vector<1x128xf32>
    %255 = arith.index_cast %249 : i32 to index
    %c0_92 = arith.constant 0 : index
    %256 = vector.load %arg28[%255, %c0_92] : memref<8x128xf32, #tpu.memory_space<vmem>>, vector<1x128xf32>
    tpu.vector_store %arg28[%255, %c0_92], %254 {strides = array<i32>} : memref<8x128xf32, #tpu.memory_space<vmem>>, vector<1x128xf32>,
    %c4_i32_93 = arith.constant 4 : i32
    %257 = arith.addi %0, %c4_i32_93 : i32
    %258 = arith.index_cast %257 : i32 to index
    %259 = memref.load %arg1[%258] : memref<16xi32, #tpu.memory_space<smem>>
    %260 = arith.index_cast %259 : i32 to index
    %c0_94 = arith.constant 0 : index
    %261 = vector.load %arg28[%260, %c0_94] : memref<8x128xf32, #tpu.memory_space<vmem>>, vector<1x128xf32>
    %262 = arith.index_cast %c4_i32_93 : i32 to index
    %c0_95 = arith.constant 0 : index
    %263 = vector.load %arg32[%262, %c0_95] : memref<8x128xf32, #tpu.memory_space<vmem>>, vector<1x128xf32>
    %264 = arith.addf %261, %263 : vector<1x128xf32>
    %265 = arith.index_cast %259 : i32 to index
    %c0_96 = arith.constant 0 : index
    %266 = vector.load %arg28[%265, %c0_96] : memref<8x128xf32, #tpu.memory_space<vmem>>, vector<1x128xf32>
    tpu.vector_store %arg28[%265, %c0_96], %264 {strides = array<i32>} : memref<8x128xf32, #tpu.memory_space<vmem>>, vector<1x128xf32>,
    %c5_i32_97 = arith.constant 5 : i32
    %267 = arith.addi %0, %c5_i32_97 : i32
    %268 = arith.index_cast %267 : i32 to index
    %269 = memref.load %arg1[%268] : memref<16xi32, #tpu.memory_space<smem>>
    %270 = arith.index_cast %269 : i32 to index
    %c0_98 = arith.constant 0 : index
    %271 = vector.load %arg28[%270, %c0_98] : memref<8x128xf32, #tpu.memory_space<vmem>>, vector<1x128xf32>
    %272 = arith.index_cast %c5_i32_97 : i32 to index
    %c0_99 = arith.constant 0 : index
    %273 = vector.load %arg32[%272, %c0_99] : memref<8x128xf32, #tpu.memory_space<vmem>>, vector<1x128xf32>
    %274 = arith.addf %271, %273 : vector<1x128xf32>
    %275 = arith.index_cast %269 : i32 to index
    %c0_100 = arith.constant 0 : index
    %276 = vector.load %arg28[%275, %c0_100] : memref<8x128xf32, #tpu.memory_space<vmem>>, vector<1x128xf32>
    tpu.vector_store %arg28[%275, %c0_100], %274 {strides = array<i32>} : memref<8x128xf32, #tpu.memory_space<vmem>>, vector<1x128xf32>,
    %c6_i32_101 = arith.constant 6 : i32
    %277 = arith.addi %0, %c6_i32_101 : i32
    %278 = arith.index_cast %277 : i32 to index
    %279 = memref.load %arg1[%278] : memref<16xi32, #tpu.memory_space<smem>>
    %280 = arith.index_cast %279 : i32 to index
    %c0_102 = arith.constant 0 : index
    %281 = vector.load %arg28[%280, %c0_102] : memref<8x128xf32, #tpu.memory_space<vmem>>, vector<1x128xf32>
    %282 = arith.index_cast %c6_i32_101 : i32 to index
    %c0_103 = arith.constant 0 : index
    %283 = vector.load %arg32[%282, %c0_103] : memref<8x128xf32, #tpu.memory_space<vmem>>, vector<1x128xf32>
    %284 = arith.addf %281, %283 : vector<1x128xf32>
    %285 = arith.index_cast %279 : i32 to index
    %c0_104 = arith.constant 0 : index
    %286 = vector.load %arg28[%285, %c0_104] : memref<8x128xf32, #tpu.memory_space<vmem>>, vector<1x128xf32>
    tpu.vector_store %arg28[%285, %c0_104], %284 {strides = array<i32>} : memref<8x128xf32, #tpu.memory_space<vmem>>, vector<1x128xf32>,
    %c7_i32_105 = arith.constant 7 : i32
    %287 = arith.addi %0, %c7_i32_105 : i32
    %288 = arith.index_cast %287 : i32 to index
    %289 = memref.load %arg1[%288] : memref<16xi32, #tpu.memory_space<smem>>
    %290 = arith.index_cast %289 : i32 to index
    %c0_106 = arith.constant 0 : index
    %291 = vector.load %arg28[%290, %c0_106] : memref<8x128xf32, #tpu.memory_space<vmem>>, vector<1x128xf32>
    %292 = arith.index_cast %c7_i32_105 : i32 to index
    %c0_107 = arith.constant 0 : index
    %293 = vector.load %arg32[%292, %c0_107] : memref<8x128xf32, #tpu.memory_space<vmem>>, vector<1x128xf32>
    %294 = arith.addf %291, %293 : vector<1x128xf32>
    %295 = arith.index_cast %289 : i32 to index
    %c0_108 = arith.constant 0 : index
    %296 = vector.load %arg28[%295, %c0_108] : memref<8x128xf32, #tpu.memory_space<vmem>>, vector<1x128xf32>
    tpu.vector_store %arg28[%295, %c0_108], %294 {strides = array<i32>} : memref<8x128xf32, #tpu.memory_space<vmem>>, vector<1x128xf32>,
    %c8_i32_109 = arith.constant 8 : i32
    %c1_i32_110 = arith.constant 1 : i32
    %297 = arith.cmpi eq, %arg0, %c1_i32_110 : i32
    %298 = arith.extui %297 : i1 to i32
    %c0_i32_111 = arith.constant 0 : i32
    %299 = arith.cmpi ne, %298, %c0_i32_111 : i32
    scf.if %299 {
      %c0_112 = arith.constant 0 : index
      %c0_113 = arith.constant 0 : index
      %300 = vector.load %arg5[%c0_112, %c0_113] : memref<8x1xf32, #tpu.memory_space<vmem>>, vector<8x1xf32>
      %cst_114 = arith.constant 1.000000e+00 : f32
      %301 = vector.broadcast %cst_114 : f32 to vector<8x1xf32>
      %302 = arith.maximumf %300, %301 : vector<8x1xf32>
      %c0_115 = arith.constant 0 : index
      %c0_116 = arith.constant 0 : index
      %303 = vector.load %arg28[%c0_115, %c0_116] : memref<8x128xf32, #tpu.memory_space<vmem>>, vector<8x128xf32>
      %304 = vector.broadcast %302 : vector<8x1xf32> to vector<8x128xf32>
      %305 = arith.divf %303, %304 : vector<8x128xf32>
      %cst_117 = arith.constant dense<0.000000e+00> : vector<8xf32>
      %306 = vector.multi_reduction <add>, %305, %cst_117 [1] : vector<8x128xf32> to vector<8xf32>
      %307 = vector.shape_cast %306 : vector<8xf32> to vector<8x1xf32>
      %cst_118 = arith.constant 1.250000e-01 : f32
      %308 = vector.broadcast %cst_118 : f32 to vector<8x1xf32>
      %309 = arith.mulf %307, %308 : vector<8x1xf32>
      %310 = arith.mulf %305, %305 : vector<8x128xf32>
      %cst_119 = arith.constant dense<0.000000e+00> : vector<8xf32>
      %311 = vector.multi_reduction <add>, %310, %cst_119 [1] : vector<8x128xf32> to vector<8xf32>
      %312 = vector.shape_cast %311 : vector<8xf32> to vector<8x1xf32>
      %cst_120 = arith.constant 1.250000e-01 : f32
      %313 = vector.broadcast %cst_120 : f32 to vector<8x1xf32>
      %314 = arith.mulf %312, %313 : vector<8x1xf32>
      %315 = arith.mulf %309, %309 : vector<8x1xf32>
      %316 = arith.subf %314, %315 : vector<8x1xf32>
      %317 = vector.broadcast %309 : vector<8x1xf32> to vector<8x128xf32>
      %318 = arith.subf %305, %317 : vector<8x128xf32>
      %cst_121 = arith.constant 9.99999974E-6 : f32
      %319 = vector.broadcast %cst_121 : f32 to vector<8x1xf32>
      %320 = arith.addf %316, %319 : vector<8x1xf32>
      %321 = math.rsqrt %320 : vector<8x1xf32>
      %322 = vector.broadcast %321 : vector<8x1xf32> to vector<8x128xf32>
      %323 = arith.mulf %318, %322 : vector<8x128xf32>
      %c0_122 = arith.constant 0 : index
      %c0_123 = arith.constant 0 : index
      %324 = vector.load %arg16[%c0_122, %c0_123] : memref<1x128xf32, #tpu.memory_space<vmem>>, vector<1x128xf32>
      %325 = vector.broadcast %324 : vector<1x128xf32> to vector<8x128xf32>
      %326 = arith.mulf %323, %325 : vector<8x128xf32>
      %c0_124 = arith.constant 0 : index
      %c0_125 = arith.constant 0 : index
      %327 = vector.load %arg17[%c0_124, %c0_125] : memref<1x128xf32, #tpu.memory_space<vmem>>, vector<1x128xf32>
      %328 = vector.broadcast %327 : vector<1x128xf32> to vector<8x128xf32>
      %329 = arith.addf %326, %328 : vector<8x128xf32>
      %c0_126 = arith.constant 0 : index
      %c0_127 = arith.constant 0 : index
      %330 = vector.load %arg18[%c0_126, %c0_127] : memref<128x128xf32, #tpu.memory_space<vmem>>, vector<128x128xf32>
      %cst_128 = arith.constant dense<0.000000e+00> : vector<8x128xf32>
      %331 = tpu.matmul %329, %330, %cst_128 {dimension_numbers = #tpu.dot_dimension_numbers<[1], [0], [0], [1], [0, 0, 1, 1], [], []>} : vector<8x128xf32>, vector<128x128xf32>, vector<8x128xf32> -> vector<8x128xf32>
      %c0_129 = arith.constant 0 : index
      %c0_130 = arith.constant 0 : index
      %332 = vector.load %arg19[%c0_129, %c0_130] : memref<1x128xf32, #tpu.memory_space<vmem>>, vector<1x128xf32>
      %333 = vector.broadcast %332 : vector<1x128xf32> to vector<8x128xf32>
      %334 = arith.addf %331, %333 : vector<8x128xf32>
      %cst_131 = arith.constant 0.000000e+00 : f32
      %335 = vector.broadcast %cst_131 : f32 to vector<8x128xf32>
      %336 = arith.maximumf %334, %335 : vector<8x128xf32>
      %c0_132 = arith.constant 0 : index
      %c0_133 = arith.constant 0 : index
      %337 = vector.load %arg20[%c0_132, %c0_133] : memref<128x128xf32, #tpu.memory_space<vmem>>, vector<128x128xf32>
      %cst_134 = arith.constant dense<0.000000e+00> : vector<8x128xf32>
      %338 = tpu.matmul %336, %337, %cst_134 {dimension_numbers = #tpu.dot_dimension_numbers<[1], [0], [0], [1], [0, 0, 1, 1], [], []>} : vector<8x128xf32>, vector<128x128xf32>, vector<8x128xf32> -> vector<8x128xf32>
      %c0_135 = arith.constant 0 : index
      %c0_136 = arith.constant 0 : index
      %339 = vector.load %arg21[%c0_135, %c0_136] : memref<1x128xf32, #tpu.memory_space<vmem>>, vector<1x128xf32>
      %340 = vector.broadcast %339 : vector<1x128xf32> to vector<8x128xf32>
      %341 = arith.addf %338, %340 : vector<8x128xf32>
      %cst_137 = arith.constant dense<0.000000e+00> : vector<8xf32>
      %342 = vector.multi_reduction <add>, %341, %cst_137 [1] : vector<8x128xf32> to vector<8xf32>
      %343 = vector.shape_cast %342 : vector<8xf32> to vector<8x1xf32>
      %cst_138 = arith.constant 1.250000e-01 : f32
      %344 = vector.broadcast %cst_138 : f32 to vector<8x1xf32>
      %345 = arith.mulf %343, %344 : vector<8x1xf32>
      %346 = arith.mulf %341, %341 : vector<8x128xf32>
      %cst_139 = arith.constant dense<0.000000e+00> : vector<8xf32>
      %347 = vector.multi_reduction <add>, %346, %cst_139 [1] : vector<8x128xf32> to vector<8xf32>
      %348 = vector.shape_cast %347 : vector<8xf32> to vector<8x1xf32>
      %cst_140 = arith.constant 1.250000e-01 : f32
      %349 = vector.broadcast %cst_140 : f32 to vector<8x1xf32>
      %350 = arith.mulf %348, %349 : vector<8x1xf32>
      %351 = arith.mulf %345, %345 : vector<8x1xf32>
      %352 = arith.subf %350, %351 : vector<8x1xf32>
      %353 = vector.broadcast %345 : vector<8x1xf32> to vector<8x128xf32>
      %354 = arith.subf %341, %353 : vector<8x128xf32>
      %cst_141 = arith.constant 9.99999974E-6 : f32
      %355 = vector.broadcast %cst_141 : f32 to vector<8x1xf32>
      %356 = arith.addf %352, %355 : vector<8x1xf32>
      %357 = math.rsqrt %356 : vector<8x1xf32>
      %358 = vector.broadcast %357 : vector<8x1xf32> to vector<8x128xf32>
      %359 = arith.mulf %354, %358 : vector<8x128xf32>
      %c0_142 = arith.constant 0 : index
      %c0_143 = arith.constant 0 : index
      %360 = vector.load %arg22[%c0_142, %c0_143] : memref<1x128xf32, #tpu.memory_space<vmem>>, vector<1x128xf32>
      %361 = vector.broadcast %360 : vector<1x128xf32> to vector<8x128xf32>
      %362 = arith.mulf %359, %361 : vector<8x128xf32>
      %c0_144 = arith.constant 0 : index
      %c0_145 = arith.constant 0 : index
      %363 = vector.load %arg23[%c0_144, %c0_145] : memref<1x128xf32, #tpu.memory_space<vmem>>, vector<1x128xf32>
      %364 = vector.broadcast %363 : vector<1x128xf32> to vector<8x128xf32>
      %365 = arith.addf %362, %364 : vector<8x128xf32>
      %c0_146 = arith.constant 0 : index
      %c0_147 = arith.constant 0 : index
      %366 = vector.load %arg24[%c0_146, %c0_147] : memref<8x128xf32, #tpu.memory_space<vmem>>, vector<8x128xf32>
      tpu.vector_store %arg24[%c0_146, %c0_147], %365 {strides = array<i32>} : memref<8x128xf32, #tpu.memory_space<vmem>>, vector<8x128xf32>,
    } else {
    }
    return
  }
  func.func @transform_0(%arg0: i32, %arg1: memref<16xi32, #tpu.memory_space<smem>>, %arg2: memref<16xi32, #tpu.memory_space<smem>>) -> (i32, i32) {
    %c0_i32 = arith.constant 0 : i32
    %c0_i32_0 = arith.constant 0 : i32
    %c0_i32_1 = arith.constant 0 : i32
    return %c0_i32, %c0_i32_0 : i32, i32
  }
  func.func @transform_1(%arg0: i32, %arg1: memref<16xi32, #tpu.memory_space<smem>>, %arg2: memref<16xi32, #tpu.memory_space<smem>>) -> (i32, i32) {
    %c0_i32 = arith.constant 0 : i32
    %c0_i32_0 = arith.constant 0 : i32
    return %arg0, %c0_i32 : i32, i32
  }
  func.func @transform_2(%arg0: i32, %arg1: memref<16xi32, #tpu.memory_space<smem>>, %arg2: memref<16xi32, #tpu.memory_space<smem>>) -> (i32, i32) {
    %c0_i32 = arith.constant 0 : i32
    %c0_i32_0 = arith.constant 0 : i32
    %c0_i32_1 = arith.constant 0 : i32
    return %c0_i32, %c0_i32_0 : i32, i32
  }
  func.func @transform_3(%arg0: i32, %arg1: memref<16xi32, #tpu.memory_space<smem>>, %arg2: memref<16xi32, #tpu.memory_space<smem>>) -> (i32, i32) {
    %c0_i32 = arith.constant 0 : i32
    %c0_i32_0 = arith.constant 0 : i32
    %c0_i32_1 = arith.constant 0 : i32
    return %c0_i32, %c0_i32_0 : i32, i32
  }
  func.func @transform_4(%arg0: i32, %arg1: memref<16xi32, #tpu.memory_space<smem>>, %arg2: memref<16xi32, #tpu.memory_space<smem>>) -> (i32, i32) {
    %c0_i32 = arith.constant 0 : i32
    %c0_i32_0 = arith.constant 0 : i32
    %c0_i32_1 = arith.constant 0 : i32
    return %c0_i32, %c0_i32_0 : i32, i32
  }
  func.func @transform_5(%arg0: i32, %arg1: memref<16xi32, #tpu.memory_space<smem>>, %arg2: memref<16xi32, #tpu.memory_space<smem>>) -> (i32, i32) {
    %c0_i32 = arith.constant 0 : i32
    %c0_i32_0 = arith.constant 0 : i32
    %c0_i32_1 = arith.constant 0 : i32
    return %c0_i32, %c0_i32_0 : i32, i32
  }
  func.func @transform_6(%arg0: i32, %arg1: memref<16xi32, #tpu.memory_space<smem>>, %arg2: memref<16xi32, #tpu.memory_space<smem>>) -> (i32, i32) {
    %c0_i32 = arith.constant 0 : i32
    %c0_i32_0 = arith.constant 0 : i32
    %c0_i32_1 = arith.constant 0 : i32
    return %c0_i32, %c0_i32_0 : i32, i32
  }
  func.func @transform_7(%arg0: i32, %arg1: memref<16xi32, #tpu.memory_space<smem>>, %arg2: memref<16xi32, #tpu.memory_space<smem>>) -> (i32, i32) {
    %c0_i32 = arith.constant 0 : i32
    %c0_i32_0 = arith.constant 0 : i32
    %c0_i32_1 = arith.constant 0 : i32
    return %c0_i32, %c0_i32_0 : i32, i32
  }
  func.func @transform_8(%arg0: i32, %arg1: memref<16xi32, #tpu.memory_space<smem>>, %arg2: memref<16xi32, #tpu.memory_space<smem>>) -> (i32, i32) {
    %c0_i32 = arith.constant 0 : i32
    %c0_i32_0 = arith.constant 0 : i32
    %c0_i32_1 = arith.constant 0 : i32
    return %c0_i32, %c0_i32_0 : i32, i32
  }
  func.func @transform_9(%arg0: i32, %arg1: memref<16xi32, #tpu.memory_space<smem>>, %arg2: memref<16xi32, #tpu.memory_space<smem>>) -> (i32, i32) {
    %c0_i32 = arith.constant 0 : i32
    %c0_i32_0 = arith.constant 0 : i32
    %c0_i32_1 = arith.constant 0 : i32
    return %c0_i32, %c0_i32_0 : i32, i32
  }
  func.func @transform_10(%arg0: i32, %arg1: memref<16xi32, #tpu.memory_space<smem>>, %arg2: memref<16xi32, #tpu.memory_space<smem>>) -> (i32, i32) {
    %c0_i32 = arith.constant 0 : i32
    %c0_i32_0 = arith.constant 0 : i32
    %c0_i32_1 = arith.constant 0 : i32
    return %c0_i32, %c0_i32_0 : i32, i32
  }
  func.func @transform_11(%arg0: i32, %arg1: memref<16xi32, #tpu.memory_space<smem>>, %arg2: memref<16xi32, #tpu.memory_space<smem>>) -> (i32, i32) {
    %c0_i32 = arith.constant 0 : i32
    %c0_i32_0 = arith.constant 0 : i32
    %c0_i32_1 = arith.constant 0 : i32
    return %c0_i32, %c0_i32_0 : i32, i32
  }
  func.func @transform_12(%arg0: i32, %arg1: memref<16xi32, #tpu.memory_space<smem>>, %arg2: memref<16xi32, #tpu.memory_space<smem>>) -> (i32, i32) {
    %c0_i32 = arith.constant 0 : i32
    %c0_i32_0 = arith.constant 0 : i32
    %c0_i32_1 = arith.constant 0 : i32
    return %c0_i32, %c0_i32_0 : i32, i32
  }
  func.func @transform_13(%arg0: i32, %arg1: memref<16xi32, #tpu.memory_space<smem>>, %arg2: memref<16xi32, #tpu.memory_space<smem>>) -> (i32, i32) {
    %c0_i32 = arith.constant 0 : i32
    %c0_i32_0 = arith.constant 0 : i32
    %c0_i32_1 = arith.constant 0 : i32
    return %c0_i32, %c0_i32_0 : i32, i32
  }
  func.func @transform_14(%arg0: i32, %arg1: memref<16xi32, #tpu.memory_space<smem>>, %arg2: memref<16xi32, #tpu.memory_space<smem>>) -> (i32, i32) {
    %c0_i32 = arith.constant 0 : i32
    %c0_i32_0 = arith.constant 0 : i32
    %c0_i32_1 = arith.constant 0 : i32
    return %c0_i32, %c0_i32_0 : i32, i32
  }
  func.func @transform_15(%arg0: i32, %arg1: memref<16xi32, #tpu.memory_space<smem>>, %arg2: memref<16xi32, #tpu.memory_space<smem>>) -> (i32, i32) {
    %c0_i32 = arith.constant 0 : i32
    %c0_i32_0 = arith.constant 0 : i32
    %c0_i32_1 = arith.constant 0 : i32
    return %c0_i32, %c0_i32_0 : i32, i32
  }
  func.func @transform_16(%arg0: i32, %arg1: memref<16xi32, #tpu.memory_space<smem>>, %arg2: memref<16xi32, #tpu.memory_space<smem>>) -> (i32, i32) {
    %c0_i32 = arith.constant 0 : i32
    %c0_i32_0 = arith.constant 0 : i32
    %c0_i32_1 = arith.constant 0 : i32
    return %c0_i32, %c0_i32_0 : i32, i32
  }
  func.func @transform_17(%arg0: i32, %arg1: memref<16xi32, #tpu.memory_space<smem>>, %arg2: memref<16xi32, #tpu.memory_space<smem>>) -> (i32, i32) {
    %c0_i32 = arith.constant 0 : i32
    %c0_i32_0 = arith.constant 0 : i32
    %c0_i32_1 = arith.constant 0 : i32
    return %c0_i32, %c0_i32_0 : i32, i32
  }
  func.func @transform_18(%arg0: i32, %arg1: memref<16xi32, #tpu.memory_space<smem>>, %arg2: memref<16xi32, #tpu.memory_space<smem>>) -> (i32, i32) {
    %c0_i32 = arith.constant 0 : i32
    %c0_i32_0 = arith.constant 0 : i32
    %c0_i32_1 = arith.constant 0 : i32
    return %c0_i32, %c0_i32_0 : i32, i32
  }
  func.func @transform_19(%arg0: i32, %arg1: memref<16xi32, #tpu.memory_space<smem>>, %arg2: memref<16xi32, #tpu.memory_space<smem>>) -> (i32, i32) {
    %c0_i32 = arith.constant 0 : i32
    %c0_i32_0 = arith.constant 0 : i32
    %c0_i32_1 = arith.constant 0 : i32
    return %c0_i32, %c0_i32_0 : i32, i32
  }
  func.func @transform_20(%arg0: i32, %arg1: memref<16xi32, #tpu.memory_space<smem>>, %arg2: memref<16xi32, #tpu.memory_space<smem>>) -> (i32, i32) {
    %c0_i32 = arith.constant 0 : i32
    %c0_i32_0 = arith.constant 0 : i32
    %c0_i32_1 = arith.constant 0 : i32
    return %c0_i32, %c0_i32_0 : i32, i32
  }
  func.func @transform_21(%arg0: i32, %arg1: memref<16xi32, #tpu.memory_space<smem>>, %arg2: memref<16xi32, #tpu.memory_space<smem>>) -> (i32, i32) {
    %c0_i32 = arith.constant 0 : i32
    %c0_i32_0 = arith.constant 0 : i32
    %c0_i32_1 = arith.constant 0 : i32
    return %c0_i32, %c0_i32_0 : i32, i32
  }
}

</mosaic_0001>

<llo_original>
// kernel: tpu_custom_call.1
$region0: #{tpu_custom_call.1}
  #allocation0 [shape = 'u32[]', space=smem, size = 0x4, offset = 0x4, fixed_abs, tag = 'smem constant byte address 0x4 - core index']
  #allocation1 [shape = 'u32[144,128]{1,0:T(1,128)}', space=vmem, size = 0x12000, scoped, tag = 'internal scratch']
  #allocation2 [shape = 'f32[8,128]{1,0:T(8,128)}', space=vmem, size = 0x1000, scoped, tag = 'scratch operand']
  #allocation3 [shape = 'f32[8,128]{1,0:T(8,128)}', space=vmem, size = 0x1000, scoped, tag = 'scratch operand']
  #allocation4 [shape = 'f32[8,128]{1,0:T(8,128)}', space=vmem, size = 0x1000, scoped, tag = 'scratch operand']
  #allocation5 [shape = 'f32[8,128]{1,0:T(8,128)}', space=vmem, size = 0x1000, scoped, tag = 'scratch operand']
  #allocation6 [shape = 'f32[8,128]{1,0:T(8,128)}', space=vmem, size = 0x1000, scoped, tag = 'scratch operand']
  #allocation7 [shape = 'f32[8,128]{1,0:T(8,128)}', space=vmem, size = 0x1000, scoped, tag = 'scratch operand']
  #allocation8 [shape = 'f32[8,128]{1,0:T(8,128)}', space=vmem, size = 0x1000, scoped, tag = 'scratch operand']
  #allocation9 [shape = 'f32[8,128]{1,0:T(8,128)}', space=vmem, size = 0x1000, scoped, tag = 'scratch operand']
  #allocation10 [shape = 's32[1]{0}', space=sflag, size = 0x4, scoped, tag = 'scoped memory for tpu_custom_call.1']
  #allocation11 [shape = 'u8[512]{0}', space=smem, size = 0x200, scoped, tag = 'prefetched SMEM operand 0']
  #allocation12 [shape = 'u8[512]{0}', space=smem, size = 0x200, scoped, tag = 'prefetched SMEM operand 1']
  %s0 = inlined_call_operand.vmem [shape: s32[16], index: 0, kind: input, shape index: {}]
  %s1 = inlined_call_operand.vmem [shape: s32[16], index: 1, kind: input, shape index: {}]
  %s2 = inlined_call_operand.vmem [shape: f32[8,16], index: 2, kind: input, shape index: {}]
  %s3 = inlined_call_operand.vmem [shape: f32[16,4], index: 3, kind: input, shape index: {}]
  %s4 = inlined_call_operand.vmem [shape: f32[8,1], index: 4, kind: input, shape index: {}]
  %s5 = inlined_call_operand.vmem [shape: f32[16,128], index: 5, kind: input, shape index: {}]
  %s6 = inlined_call_operand.vmem [shape: f32[1,128], index: 6, kind: input, shape index: {}]
  %s7 = inlined_call_operand.hbm [shape: f32[16,128], index: 7, kind: input, shape index: {}]
  %s8 = inlined_call_operand.hbm [shape: f32[1,128], index: 8, kind: input, shape index: {}]
  %s9 = inlined_call_operand.hbm [shape: f32[16,128], index: 9, kind: input, shape index: {}]
  %s10 = inlined_call_operand.vmem [shape: f32[1,128], index: 10, kind: input, shape index: {}]
  %s11 = inlined_call_operand.vmem [shape: f32[4,128], index: 11, kind: input, shape index: {}]
  %s12 = inlined_call_operand.vmem [shape: f32[1,128], index: 12, kind: input, shape index: {}]
  %s13 = inlined_call_operand.vmem [shape: f32[32,128], index: 13, kind: input, shape index: {}]
  %s14 = inlined_call_operand.vmem [shape: f32[1,128], index: 14, kind: input, shape index: {}]
  %s15 = inlined_call_operand.vmem [shape: f32[1,128], index: 15, kind: input, shape index: {}]
  %s16 = inlined_call_operand.vmem [shape: f32[1,128], index: 16, kind: input, shape index: {}]
  %s17 = inlined_call_operand.hbm [shape: f32[128,128], index: 17, kind: input, shape index: {}]
  %s18 = inlined_call_operand.vmem [shape: f32[1,128], index: 18, kind: input, shape index: {}]
  %s19 = inlined_call_operand.hbm [shape: f32[128,128], index: 19, kind: input, shape index: {}]
  %s20 = inlined_call_operand.vmem [shape: f32[1,128], index: 20, kind: input, shape index: {}]
  %s21 = inlined_call_operand.vmem [shape: f32[1,128], index: 21, kind: input, shape index: {}]
  %s22 = inlined_call_operand.vmem [shape: f32[1,128], index: 22, kind: input, shape index: {}]
  %s23 = inlined_call_operand.hbm [shape: f32[8,128], index: 23, kind: output, shape index: {}]
  %s24 = sld [smem:[#allocation0]]
  $region145: #{tpu_custom_call.1} parent=0
    _
  %s26 = ssub.s32 1, %s24
  %s27 = scalar_select 0, %s26, %s24
  %s28 = sshll.u32 %s0, 4
  %s29 = int_to_ptr.vmem [resolvable:$true] %s28
  %31 = dma.vmem_to_smem %s29, 16, [#allocation11], [#allocation10]
  %s32 = sshll.u32 %s1, 4
  %s33 = int_to_ptr.vmem [resolvable:$true] %s32
  %35 = dma.vmem_to_smem %s33, 16, [#allocation12], [#allocation10]
  %36 = dma.done [#allocation10], 32
  %37 = sfence
  $region1: #{tpu_custom_call.1} parent=0
    #allocation13 [shape = 'u8[8192]{0}', space=vmem, size = 0x2000, scoped, tag = 'input window, operand 7, single buffered']
    #allocation14 [shape = 's32[2]{0}', space=sflag, size = 0x8, scoped, tag = 'scoped memory for tpu_custom_call.1']
    #allocation15 [shape = 's32[2]{0}', space=sflag, size = 0x8, scoped, tag = 'scoped memory for tpu_custom_call.1']
    #allocation16 [shape = 'u8[512]{0}', space=vmem, size = 0x400, scoped, tag = 'input window, operand 8, single buffered']
    #allocation17 [shape = 's32[1]{0}', space=sflag, size = 0x4, scoped, tag = 'scoped memory for tpu_custom_call.1']
    #allocation18 [shape = 'u8[8192]{0}', space=vmem, size = 0x2000, scoped, tag = 'input window, operand 9, single buffered']
    #allocation19 [shape = 'u8[65536]{0}', space=vmem, size = 0x10000, scoped, tag = 'input window, operand 17, single buffered']
    #allocation20 [shape = 's32[1]{0}', space=sflag, size = 0x4, scoped, tag = 'scoped memory for tpu_custom_call.1']
    #allocation21 [shape = 'u8[65536]{0}', space=vmem, size = 0x10000, scoped, tag = 'input window, operand 19, single buffered']
    #allocation22 [shape = 'u8[4096]{0}', space=vmem, size = 0x1000, scoped, tag = 'output window, operand 0, single buffered']
    %38 = vsyncpa [#allocation14], 0
    %39 = vsyncpa [#allocation17], 0
    %40 = vsyncpa [#allocation20], 0
    %41 = vsyncpa [#allocation15], 0
    loop: start=0, step=1, limit=4
    $region2: #{tpu_custom_call.1} parent=1 // loop_pre_header
      _
    $region3: #{tpu_custom_call.1} parent=1 // loop_header
      %s43 = sphi 0, %s47
      %p44 = scmp.ge.s32.totalorder %s43, 4
      %s51 = sphi 0, %s51
      %s53 = sphi 0, %s51
      %s54 = sphi 0, %s53
      %s68 = sphi 0, %s54
      %s74 = sphi 0, %s76
      %s77 = sphi 0, %s74
      %s78 = sphi 0, %s77
      %s94 = sphi 0, %s78
      %s98 = sphi 0, %s98
      %s100 = sphi 0, %s98
      %s101 = sphi 0, %s100
      %s115 = sphi 0, %s101
      %s119 = sphi 0, %s119
      %s121 = sphi 0, %s119
      %s122 = sphi 0, %s121
      %s136 = sphi 0, %s122
      %s140 = sphi 0, %s140
      %s142 = sphi 0, %s140
      %s143 = sphi 0, %s142
      %s157 = sphi 0, %s143
      %s161 = sphi 0, %s161
      %s163 = sphi 0, %s161
      %s164 = sphi 0, %s163
      %s178 = sphi 0, %s164
      %s182 = sphi 0, %s182
      %s184 = sphi 0, %s182
      %s185 = sphi 0, %s184
      %s199 = sphi 0, %s185
      %s203 = sphi 0, %s203
      %s205 = sphi 0, %s203
      %s206 = sphi 0, %s205
      %s220 = sphi 0, %s206
      %s224 = sphi 0, %s224
      %s226 = sphi 0, %s224
      %s227 = sphi 0, %s226
      %s241 = sphi 0, %s227
      %s245 = sphi 0, %s245
      %s247 = sphi 0, %s245
      %s248 = sphi 0, %s247
      %s262 = sphi 0, %s248
      %s266 = sphi 0, %s266
      %s268 = sphi 0, %s266
      %s269 = sphi 0, %s268
      %s283 = sphi 0, %s269
      %s287 = sphi 0, %s287
      %s289 = sphi 0, %s287
      %s290 = sphi 0, %s289
      %s304 = sphi 0, %s290
      %s308 = sphi 0, %s308
      %s310 = sphi 0, %s308
      %s311 = sphi 0, %s310
      %s325 = sphi 0, %s311
      %s329 = sphi 0, %s329
      %s331 = sphi 0, %s329
      %s332 = sphi 0, %s331
      %s346 = sphi 0, %s332
      %s350 = sphi 0, %s350
      %s352 = sphi 0, %s350
      %s353 = sphi 0, %s352
      %s367 = sphi 0, %s353
      %s371 = sphi 0, %s371
      %s373 = sphi 0, %s371
      %s374 = sphi 0, %s373
      %s388 = sphi 0, %s374
      %s392 = sphi 0, %s392
      %s394 = sphi 0, %s392
      %s395 = sphi 0, %s394
      %s409 = sphi 0, %s395
      %s413 = sphi 0, %s413
      %s415 = sphi 0, %s413
      %s416 = sphi 0, %s415
      %s430 = sphi 0, %s416
      %s434 = sphi 0, %s434
      %s436 = sphi 0, %s434
      %s437 = sphi 0, %s436
      %s451 = sphi 0, %s437
      %s455 = sphi 0, %s455
      %s457 = sphi 0, %s455
      %s458 = sphi 0, %s457
      %s472 = sphi 0, %s458
      %s476 = sphi 0, %s476
      %s478 = sphi 0, %s476
      %s479 = sphi 0, %s478
      %s493 = sphi 0, %s479
      %s497 = sphi 0, %s497
      %s499 = sphi 0, %s497
      %s500 = sphi 0, %s499
      %s514 = sphi 0, %s500
    $region4: #{tpu_custom_call.1} parent=1 // loop_header_branch
      %46 = sbr.rel (%p44) target = $region8
    $region5: #{tpu_custom_call.1} parent=1 // loop_body
      %s48 = ssub.s32 %s43, 1
      %s49 = ssub.s32 %s43, 2
      %s50 = sadd.s32 %s43, 1
      %s52 = sadd.s32 %s51, 1
      %p55 = scmp.eq.s32.totalorder %s43, 1
      %p56 = scmp.ne.s32.totalorder %s51, %s53
      %p57 = scmp.eq.s32.totalorder %s43, 0
      %p58 = por %p56, %p57
      %p59 = scmp.ne.s32.totalorder %s51, %s53
      %p60 = scmp.eq.s32.totalorder %s48, 1
      %p61 = por %p59, %p60
      %p62 = scmp.ne.s32.totalorder %s53, %s54
      %p63 = scmp.eq.s32.totalorder %s48, 0
      %p64 = por %p62, %p63
      %p65 = scmp.ne.s32.totalorder %s53, %s54
      %p66 = scmp.eq.s32.totalorder %s49, 1
      %p67 = por %p65, %p66
      %p69 = scmp.ne.s32.totalorder %s54, %s68
      %p70 = scmp.eq.s32.totalorder %s49, 0
      %p71 = por %p69, %p70
      %s72 = ssub.s32 %s43, %s50
      %p73 = scmp.eq.s32.totalorder %s72, 0
      %s75 = sadd.s32 %s74, 1
      %s76 = scalar_select %p73, %s74, %s75
      %p79 = pneg %p73
      %p80 = scmp.eq.s32.totalorder %s43, 1
      %p81 = por %p79, %p80
      %p82 = scmp.ne.s32.totalorder %s74, %s77
      %p83 = scmp.eq.s32.totalorder %s43, 0
      %p84 = por %p82, %p83
      %p85 = scmp.ne.s32.totalorder %s74, %s77
      %p86 = scmp.eq.s32.totalorder %s48, 1
      %p87 = por %p85, %p86
      %p88 = scmp.ne.s32.totalorder %s77, %s78
      %p89 = scmp.eq.s32.totalorder %s48, 0
      %p90 = por %p88, %p89
      %p91 = scmp.ne.s32.totalorder %s77, %s78
      %p92 = scmp.eq.s32.totalorder %s49, 1
      %p93 = por %p91, %p92
      %p95 = scmp.ne.s32.totalorder %s78, %s94
      %p96 = scmp.eq.s32.totalorder %s49, 0
      %p97 = por %p95, %p96
      %s99 = sadd.s32 %s98, 1
      %p102 = scmp.eq.s32.totalorder %s43, 1
      %p103 = scmp.ne.s32.totalorder %s98, %s100
      %p104 = scmp.eq.s32.totalorder %s43, 0
      %p105 = por %p103, %p104
      %p106 = scmp.ne.s32.totalorder %s98, %s100
      %p107 = scmp.eq.s32.totalorder %s48, 1
      %p108 = por %p106, %p107
      %p109 = scmp.ne.s32.totalorder %s100, %s101
      %p110 = scmp.eq.s32.totalorder %s48, 0
      %p111 = por %p109, %p110
      %p112 = scmp.ne.s32.totalorder %s100, %s101
      %p113 = scmp.eq.s32.totalorder %s49, 1
      %p114 = por %p112, %p113
      %p116 = scmp.ne.s32.totalorder %s101, %s115
      %p117 = scmp.eq.s32.totalorder %s49, 0
      %p118 = por %p116, %p117
      %s120 = sadd.s32 %s119, 1
      %p123 = scmp.eq.s32.totalorder %s43, 1
      %p124 = scmp.ne.s32.totalorder %s119, %s121
      %p125 = scmp.eq.s32.totalorder %s43, 0
      %p126 = por %p124, %p125
      %p127 = scmp.ne.s32.totalorder %s119, %s121
      %p128 = scmp.eq.s32.totalorder %s48, 1
      %p129 = por %p127, %p128
      %p130 = scmp.ne.s32.totalorder %s121, %s122
      %p131 = scmp.eq.s32.totalorder %s48, 0
      %p132 = por %p130, %p131
      %p133 = scmp.ne.s32.totalorder %s121, %s122
      %p134 = scmp.eq.s32.totalorder %s49, 1
      %p135 = por %p133, %p134
      %p137 = scmp.ne.s32.totalorder %s122, %s136
      %p138 = scmp.eq.s32.totalorder %s49, 0
      %p139 = por %p137, %p138
      %s141 = sadd.s32 %s140, 1
      %p144 = scmp.eq.s32.totalorder %s43, 1
      %p145 = scmp.ne.s32.totalorder %s140, %s142
      %p146 = scmp.eq.s32.totalorder %s43, 0
      %p147 = por %p145, %p146
      %p148 = scmp.ne.s32.totalorder %s140, %s142
      %p149 = scmp.eq.s32.totalorder %s48, 1
      %p150 = por %p148, %p149
      %p151 = scmp.ne.s32.totalorder %s142, %s143
      %p152 = scmp.eq.s32.totalorder %s48, 0
      %p153 = por %p151, %p152
      %p154 = scmp.ne.s32.totalorder %s142, %s143
      %p155 = scmp.eq.s32.totalorder %s49, 1
      %p156 = por %p154, %p155
      %p158 = scmp.ne.s32.totalorder %s143, %s157
      %p159 = scmp.eq.s32.totalorder %s49, 0
      %p160 = por %p158, %p159
      %s162 = sadd.s32 %s161, 1
      %p165 = scmp.eq.s32.totalorder %s43, 1
      %p166 = scmp.ne.s32.totalorder %s161, %s163
      %p167 = scmp.eq.s32.totalorder %s43, 0
      %p168 = por %p166, %p167
      %p169 = scmp.ne.s32.totalorder %s161, %s163
      %p170 = scmp.eq.s32.totalorder %s48, 1
      %p171 = por %p169, %p170
      %p172 = scmp.ne.s32.totalorder %s163, %s164
      %p173 = scmp.eq.s32.totalorder %s48, 0
      %p174 = por %p172, %p173
      %p175 = scmp.ne.s32.totalorder %s163, %s164
      %p176 = scmp.eq.s32.totalorder %s49, 1
      %p177 = por %p175, %p176
      %p179 = scmp.ne.s32.totalorder %s164, %s178
      %p180 = scmp.eq.s32.totalorder %s49, 0
      %p181 = por %p179, %p180
      %s183 = sadd.s32 %s182, 1
      %p186 = scmp.eq.s32.totalorder %s43, 1
      %p187 = scmp.ne.s32.totalorder %s182, %s184
      %p188 = scmp.eq.s32.totalorder %s43, 0
      %p189 = por %p187, %p188
      %p190 = scmp.ne.s32.totalorder %s182, %s184
      %p191 = scmp.eq.s32.totalorder %s48, 1
      %p192 = por %p190, %p191
      %p193 = scmp.ne.s32.totalorder %s184, %s185
      %p194 = scmp.eq.s32.totalorder %s48, 0
      %p195 = por %p193, %p194
      %p196 = scmp.ne.s32.totalorder %s184, %s185
      %p197 = scmp.eq.s32.totalorder %s49, 1
      %p198 = por %p196, %p197
      %p200 = scmp.ne.s32.totalorder %s185, %s199
      %p201 = scmp.eq.s32.totalorder %s49, 0
      %p202 = por %p200, %p201
      %s204 = sadd.s32 %s203, 1
      %p207 = scmp.eq.s32.totalorder %s43, 1
      %p208 = scmp.ne.s32.totalorder %s203, %s205
      %p209 = scmp.eq.s32.totalorder %s43, 0
      %p210 = por %p208, %p209
      %p211 = scmp.ne.s32.totalorder %s203, %s205
      %p212 = scmp.eq.s32.totalorder %s48, 1
      %p213 = por %p211, %p212
      %p214 = scmp.ne.s32.totalorder %s205, %s206
      %p215 = scmp.eq.s32.totalorder %s48, 0
      %p216 = por %p214, %p215
      %p217 = scmp.ne.s32.totalorder %s205, %s206
      %p218 = scmp.eq.s32.totalorder %s49, 1
      %p219 = por %p217, %p218
      %p221 = scmp.ne.s32.totalorder %s206, %s220
      %p222 = scmp.eq.s32.totalorder %s49, 0
      %p223 = por %p221, %p222
      %s225 = sadd.s32 %s224, 1
      %p228 = scmp.eq.s32.totalorder %s43, 1
      %p229 = scmp.ne.s32.totalorder %s224, %s226
      %p230 = scmp.eq.s32.totalorder %s43, 0
      %p231 = por %p229, %p230
      %p232 = scmp.ne.s32.totalorder %s224, %s226
      %p233 = scmp.eq.s32.totalorder %s48, 1
      %p234 = por %p232, %p233
      %p235 = scmp.ne.s32.totalorder %s226, %s227
      %p236 = scmp.eq.s32.totalorder %s48, 0
      %p237 = por %p235, %p236
      %p238 = scmp.ne.s32.totalorder %s226, %s227
      %p239 = scmp.eq.s32.totalorder %s49, 1
      %p240 = por %p238, %p239
      %p242 = scmp.ne.s32.totalorder %s227, %s241
      %p243 = scmp.eq.s32.totalorder %s49, 0
      %p244 = por %p242, %p243
      %s246 = sadd.s32 %s245, 1
      %p249 = scmp.eq.s32.totalorder %s43, 1
      %p250 = scmp.ne.s32.totalorder %s245, %s247
      %p251 = scmp.eq.s32.totalorder %s43, 0
      %p252 = por %p250, %p251
      %p253 = scmp.ne.s32.totalorder %s245, %s247
      %p254 = scmp.eq.s32.totalorder %s48, 1
      %p255 = por %p253, %p254
      %p256 = scmp.ne.s32.totalorder %s247, %s248
      %p257 = scmp.eq.s32.totalorder %s48, 0
      %p258 = por %p256, %p257
      %p259 = scmp.ne.s32.totalorder %s247, %s248
      %p260 = scmp.eq.s32.totalorder %s49, 1
      %p261 = por %p259, %p260
      %p263 = scmp.ne.s32.totalorder %s248, %s262
      %p264 = scmp.eq.s32.totalorder %s49, 0
      %p265 = por %p263, %p264
      %s267 = sadd.s32 %s266, 1
      %p270 = scmp.eq.s32.totalorder %s43, 1
      %p271 = scmp.ne.s32.totalorder %s266, %s268
      %p272 = scmp.eq.s32.totalorder %s43, 0
      %p273 = por %p271, %p272
      %p274 = scmp.ne.s32.totalorder %s266, %s268
      %p275 = scmp.eq.s32.totalorder %s48, 1
      %p276 = por %p274, %p275
      %p277 = scmp.ne.s32.totalorder %s268, %s269
      %p278 = scmp.eq.s32.totalorder %s48, 0
      %p279 = por %p277, %p278
      %p280 = scmp.ne.s32.totalorder %s268, %s269
      %p281 = scmp.eq.s32.totalorder %s49, 1
      %p282 = por %p280, %p281
      %p284 = scmp.ne.s32.totalorder %s269, %s283
      %p285 = scmp.eq.s32.totalorder %s49, 0
      %p286 = por %p284, %p285
      %s288 = sadd.s32 %s287, 1
      %p291 = scmp.eq.s32.totalorder %s43, 1
      %p292 = scmp.ne.s32.totalorder %s287, %s289
      %p293 = scmp.eq.s32.totalorder %s43, 0
      %p294 = por %p292, %p293
      %p295 = scmp.ne.s32.totalorder %s287, %s289
      %p296 = scmp.eq.s32.totalorder %s48, 1
      %p297 = por %p295, %p296
      %p298 = scmp.ne.s32.totalorder %s289, %s290
      %p299 = scmp.eq.s32.totalorder %s48, 0
      %p300 = por %p298, %p299
      %p301 = scmp.ne.s32.totalorder %s289, %s290
      %p302 = scmp.eq.s32.totalorder %s49, 1
      %p303 = por %p301, %p302
      %p305 = scmp.ne.s32.totalorder %s290, %s304
      %p306 = scmp.eq.s32.totalorder %s49, 0
      %p307 = por %p305, %p306
      %s309 = sadd.s32 %s308, 1
      %p312 = scmp.eq.s32.totalorder %s43, 1
      %p313 = scmp.ne.s32.totalorder %s308, %s310
      %p314 = scmp.eq.s32.totalorder %s43, 0
      %p315 = por %p313, %p314
      %p316 = scmp.ne.s32.totalorder %s308, %s310
      %p317 = scmp.eq.s32.totalorder %s48, 1
      %p318 = por %p316, %p317
      %p319 = scmp.ne.s32.totalorder %s310, %s311
      %p320 = scmp.eq.s32.totalorder %s48, 0
      %p321 = por %p319, %p320
      %p322 = scmp.ne.s32.totalorder %s310, %s311
      %p323 = scmp.eq.s32.totalorder %s49, 1
      %p324 = por %p322, %p323
      %p326 = scmp.ne.s32.totalorder %s311, %s325
      %p327 = scmp.eq.s32.totalorder %s49, 0
      %p328 = por %p326, %p327
      %s330 = sadd.s32 %s329, 1
      %p333 = scmp.eq.s32.totalorder %s43, 1
      %p334 = scmp.ne.s32.totalorder %s329, %s331
      %p335 = scmp.eq.s32.totalorder %s43, 0
      %p336 = por %p334, %p335
      %p337 = scmp.ne.s32.totalorder %s329, %s331
      %p338 = scmp.eq.s32.totalorder %s48, 1
      %p339 = por %p337, %p338
      %p340 = scmp.ne.s32.totalorder %s331, %s332
      %p341 = scmp.eq.s32.totalorder %s48, 0
      %p342 = por %p340, %p341
      %p343 = scmp.ne.s32.totalorder %s331, %s332
      %p344 = scmp.eq.s32.totalorder %s49, 1
      %p345 = por %p343, %p344
      %p347 = scmp.ne.s32.totalorder %s332, %s346
      %p348 = scmp.eq.s32.totalorder %s49, 0
      %p349 = por %p347, %p348
      %s351 = sadd.s32 %s350, 1
      %p354 = scmp.eq.s32.totalorder %s43, 1
      %p355 = scmp.ne.s32.totalorder %s350, %s352
      %p356 = scmp.eq.s32.totalorder %s43, 0
      %p357 = por %p355, %p356
      %p358 = scmp.ne.s32.totalorder %s350, %s352
      %p359 = scmp.eq.s32.totalorder %s48, 1
      %p360 = por %p358, %p359
      %p361 = scmp.ne.s32.totalorder %s352, %s353
      %p362 = scmp.eq.s32.totalorder %s48, 0
      %p363 = por %p361, %p362
      %p364 = scmp.ne.s32.totalorder %s352, %s353
      %p365 = scmp.eq.s32.totalorder %s49, 1
      %p366 = por %p364, %p365
      %p368 = scmp.ne.s32.totalorder %s353, %s367
      %p369 = scmp.eq.s32.totalorder %s49, 0
      %p370 = por %p368, %p369
      %s372 = sadd.s32 %s371, 1
      %p375 = scmp.eq.s32.totalorder %s43, 1
      %p376 = scmp.ne.s32.totalorder %s371, %s373
      %p377 = scmp.eq.s32.totalorder %s43, 0
      %p378 = por %p376, %p377
      %p379 = scmp.ne.s32.totalorder %s371, %s373
      %p380 = scmp.eq.s32.totalorder %s48, 1
      %p381 = por %p379, %p380
      %p382 = scmp.ne.s32.totalorder %s373, %s374
      %p383 = scmp.eq.s32.totalorder %s48, 0
      %p384 = por %p382, %p383
      %p385 = scmp.ne.s32.totalorder %s373, %s374
      %p386 = scmp.eq.s32.totalorder %s49, 1
      %p387 = por %p385, %p386
      %p389 = scmp.ne.s32.totalorder %s374, %s388
      %p390 = scmp.eq.s32.totalorder %s49, 0
      %p391 = por %p389, %p390
      %s393 = sadd.s32 %s392, 1
      %p396 = scmp.eq.s32.totalorder %s43, 1
      %p397 = scmp.ne.s32.totalorder %s392, %s394
      %p398 = scmp.eq.s32.totalorder %s43, 0
      %p399 = por %p397, %p398
      %p400 = scmp.ne.s32.totalorder %s392, %s394
      %p401 = scmp.eq.s32.totalorder %s48, 1
      %p402 = por %p400, %p401
      %p403 = scmp.ne.s32.totalorder %s394, %s395
      %p404 = scmp.eq.s32.totalorder %s48, 0
      %p405 = por %p403, %p404
      %p406 = scmp.ne.s32.totalorder %s394, %s395
      %p407 = scmp.eq.s32.totalorder %s49, 1
      %p408 = por %p406, %p407
      %p410 = scmp.ne.s32.totalorder %s395, %s409
      %p411 = scmp.eq.s32.totalorder %s49, 0
      %p412 = por %p410, %p411
      %s414 = sadd.s32 %s413, 1
      %p417 = scmp.eq.s32.totalorder %s43, 1
      %p418 = scmp.ne.s32.totalorder %s413, %s415
      %p419 = scmp.eq.s32.totalorder %s43, 0
      %p420 = por %p418, %p419
      %p421 = scmp.ne.s32.totalorder %s413, %s415
      %p422 = scmp.eq.s32.totalorder %s48, 1
      %p423 = por %p421, %p422
      %p424 = scmp.ne.s32.totalorder %s415, %s416
      %p425 = scmp.eq.s32.totalorder %s48, 0
      %p426 = por %p424, %p425
      %p427 = scmp.ne.s32.totalorder %s415, %s416
      %p428 = scmp.eq.s32.totalorder %s49, 1
      %p429 = por %p427, %p428
      %p431 = scmp.ne.s32.totalorder %s416, %s430
      %p432 = scmp.eq.s32.totalorder %s49, 0
      %p433 = por %p431, %p432
      %s435 = sadd.s32 %s434, 1
      %p438 = scmp.eq.s32.totalorder %s43, 1
      %p439 = scmp.ne.s32.totalorder %s434, %s436
      %p440 = scmp.eq.s32.totalorder %s43, 0
      %p441 = por %p439, %p440
      %p442 = scmp.ne.s32.totalorder %s434, %s436
      %p443 = scmp.eq.s32.totalorder %s48, 1
      %p444 = por %p442, %p443
      %p445 = scmp.ne.s32.totalorder %s436, %s437
      %p446 = scmp.eq.s32.totalorder %s48, 0
      %p447 = por %p445, %p446
      %p448 = scmp.ne.s32.totalorder %s436, %s437
      %p449 = scmp.eq.s32.totalorder %s49, 1
      %p450 = por %p448, %p449
      %p452 = scmp.ne.s32.totalorder %s437, %s451
      %p453 = scmp.eq.s32.totalorder %s49, 0
      %p454 = por %p452, %p453
      %s456 = sadd.s32 %s455, 1
      %p459 = scmp.eq.s32.totalorder %s43, 1
      %p460 = scmp.ne.s32.totalorder %s455, %s457
      %p461 = scmp.eq.s32.totalorder %s43, 0
      %p462 = por %p460, %p461
      %p463 = scmp.ne.s32.totalorder %s455, %s457
      %p464 = scmp.eq.s32.totalorder %s48, 1
      %p465 = por %p463, %p464
      %p466 = scmp.ne.s32.totalorder %s457, %s458
      %p467 = scmp.eq.s32.totalorder %s48, 0
      %p468 = por %p466, %p467
      %p469 = scmp.ne.s32.totalorder %s457, %s458
      %p470 = scmp.eq.s32.totalorder %s49, 1
      %p471 = por %p469, %p470
      %p473 = scmp.ne.s32.totalorder %s458, %s472
      %p474 = scmp.eq.s32.totalorder %s49, 0
      %p475 = por %p473, %p474
      %s477 = sadd.s32 %s476, 1
      %p480 = scmp.eq.s32.totalorder %s43, 1
      %p481 = scmp.ne.s32.totalorder %s476, %s478
      %p482 = scmp.eq.s32.totalorder %s43, 0
      %p483 = por %p481, %p482
      %p484 = scmp.ne.s32.totalorder %s476, %s478
      %p485 = scmp.eq.s32.totalorder %s48, 1
      %p486 = por %p484, %p485
      %p487 = scmp.ne.s32.totalorder %s478, %s479
      %p488 = scmp.eq.s32.totalorder %s48, 0
      %p489 = por %p487, %p488
      %p490 = scmp.ne.s32.totalorder %s478, %s479
      %p491 = scmp.eq.s32.totalorder %s49, 1
      %p492 = por %p490, %p491
      %p494 = scmp.ne.s32.totalorder %s479, %s493
      %p495 = scmp.eq.s32.totalorder %s49, 0
      %p496 = por %p494, %p495
      %s498 = sadd.s32 %s497, 1
      %p501 = scmp.eq.s32.totalorder %s43, 1
      %p502 = scmp.ne.s32.totalorder %s497, %s499
      %p503 = scmp.eq.s32.totalorder %s43, 0
      %p504 = por %p502, %p503
      %p505 = scmp.ne.s32.totalorder %s497, %s499
      %p506 = scmp.eq.s32.totalorder %s48, 1
      %p507 = por %p505, %p506
      %p508 = scmp.ne.s32.totalorder %s499, %s500
      %p509 = scmp.eq.s32.totalorder %s48, 0
      %p510 = por %p508, %p509
      %p511 = scmp.ne.s32.totalorder %s499, %s500
      %p512 = scmp.eq.s32.totalorder %s49, 1
      %p513 = por %p511, %p512
      %p515 = scmp.ne.s32.totalorder %s500, %s514
      %p516 = scmp.eq.s32.totalorder %s49, 0
      %p517 = por %p515, %p516
      %p518 = scmp.le.s32.totalorder 1, %s43
      %p519 = scmp.lt.s32.totalorder %s43, 3
      %p520 = pnand %p518, %p519
      %p521 = pneg %p520
      // Predicated region
      $region9: #{tpu_custom_call.1} parent=5 // pred_check
        _
      $region10: #{tpu_custom_call.1} parent=5 // pred_check_branch
        %523 = sbr.rel (%p520) target = $region12
      $region11: #{tpu_custom_call.1} parent=5 // pred_region
        %s524 = ssub.s32 %s43, 1
        // Predicated region
        $region13: #{tpu_custom_call.1} parent=11 // pred_check
          %p525 = pneg %p64
        $region14: #{tpu_custom_call.1} parent=11 // pred_check_branch
          %527 = sbr.rel (%p525) target = $region16
        $region15: #{tpu_custom_call.1} parent=11 // pred_region
          _
        $region16: #{tpu_custom_call.1} parent=11 // pred_fallthru
          _
        // Predicated region
        $region17: #{tpu_custom_call.1} parent=11 // pred_check
          %p528 = pneg %p111
        $region18: #{tpu_custom_call.1} parent=11 // pred_check_branch
          %530 = sbr.rel (%p528) target = $region20
        $region19: #{tpu_custom_call.1} parent=11 // pred_region
          _
        $region20: #{tpu_custom_call.1} parent=11 // pred_fallthru
          _
        // Predicated region
        $region21: #{tpu_custom_call.1} parent=11 // pred_check
          %p531 = pneg %p132
        $region22: #{tpu_custom_call.1} parent=11 // pred_check_branch
          %533 = sbr.rel (%p531) target = $region24
        $region23: #{tpu_custom_call.1} parent=11 // pred_region
          _
        $region24: #{tpu_custom_call.1} parent=11 // pred_fallthru
          _
        // Predicated region
        $region25: #{tpu_custom_call.1} parent=11 // pred_check
          %p534 = pneg %p153
        $region26: #{tpu_custom_call.1} parent=11 // pred_check_branch
          %536 = sbr.rel (%p534) target = $region28
        $region27: #{tpu_custom_call.1} parent=11 // pred_region
          _
        $region28: #{tpu_custom_call.1} parent=11 // pred_fallthru
          _
        // Predicated region
        $region29: #{tpu_custom_call.1} parent=11 // pred_check
          %p537 = pneg %p174
        $region30: #{tpu_custom_call.1} parent=11 // pred_check_branch
          %539 = sbr.rel (%p537) target = $region32
        $region31: #{tpu_custom_call.1} parent=11 // pred_region
          %s541 = ssub.s32 256, 256
          %542 = vsyncadd [#allocation14], %s541
          %s543 = sshll.u32 [#allocation13], 4
          %s544 = int_to_ptr.vmem [resolvable:$true] %s543
          %549 = dma.hbm_to_vmem [thread:$0]  %s7, 256, %s544, [#allocation14], 128, 128, 8
        $region32: #{tpu_custom_call.1} parent=11 // pred_fallthru
          _
        // Predicated region
        $region33: #{tpu_custom_call.1} parent=11 // pred_check
          %p550 = pneg %p195
        $region34: #{tpu_custom_call.1} parent=11 // pred_check_branch
          %552 = sbr.rel (%p550) target = $region36
        $region35: #{tpu_custom_call.1} parent=11 // pred_region
          %s554 = ssub.s32 16, 16
          %555 = vsyncadd [#allocation17], %s554
          %s557 = sshll.u32 [#allocation16], 4
          %s558 = int_to_ptr.vmem [resolvable:$true] %s557
          %560 = dma.hbm_to_vmem [thread:$0]  %s8, 16, %s558, [#allocation17]
        $region36: #{tpu_custom_call.1} parent=11 // pred_fallthru
          _
        // Predicated region
        $region37: #{tpu_custom_call.1} parent=11 // pred_check
          %p561 = pneg %p216
        $region38: #{tpu_custom_call.1} parent=11 // pred_check_branch
          %563 = sbr.rel (%p561) target = $region40
        $region39: #{tpu_custom_call.1} parent=11 // pred_region
          %s565 = ssub.s32 256, 256
          %566 = vsyncadd [#allocation17], %s565
          %s567 = sshll.u32 [#allocation18], 4
          %s568 = int_to_ptr.vmem [resolvable:$true] %s567
          %573 = dma.hbm_to_vmem [thread:$0]  %s9, 256, %s568, [#allocation17], 128, 128, 8
        $region40: #{tpu_custom_call.1} parent=11 // pred_fallthru
          _
        // Predicated region
        $region41: #{tpu_custom_call.1} parent=11 // pred_check
          %p574 = pneg %p237
        $region42: #{tpu_custom_call.1} parent=11 // pred_check_branch
          %576 = sbr.rel (%p574) target = $region44
        $region43: #{tpu_custom_call.1} parent=11 // pred_region
          _
        $region44: #{tpu_custom_call.1} parent=11 // pred_fallthru
          _
        // Predicated region
        $region45: #{tpu_custom_call.1} parent=11 // pred_check
          %p577 = pneg %p258
        $region46: #{tpu_custom_call.1} parent=11 // pred_check_branch
          %579 = sbr.rel (%p577) target = $region48
        $region47: #{tpu_custom_call.1} parent=11 // pred_region
          _
        $region48: #{tpu_custom_call.1} parent=11 // pred_fallthru
          _
        // Predicated region
        $region49: #{tpu_custom_call.1} parent=11 // pred_check
          %p580 = pneg %p279
        $region50: #{tpu_custom_call.1} parent=11 // pred_check_branch
          %582 = sbr.rel (%p580) target = $region52
        $region51: #{tpu_custom_call.1} parent=11 // pred_region
          _
        $region52: #{tpu_custom_call.1} parent=11 // pred_fallthru
          _
        // Predicated region
        $region53: #{tpu_custom_call.1} parent=11 // pred_check
          %p583 = pneg %p300
        $region54: #{tpu_custom_call.1} parent=11 // pred_check_branch
          %585 = sbr.rel (%p583) target = $region56
        $region55: #{tpu_custom_call.1} parent=11 // pred_region
          _
        $region56: #{tpu_custom_call.1} parent=11 // pred_fallthru
          _
        // Predicated region
        $region57: #{tpu_custom_call.1} parent=11 // pred_check
          %p586 = pneg %p321
        $region58: #{tpu_custom_call.1} parent=11 // pred_check_branch
          %588 = sbr.rel (%p586) target = $region60
        $region59: #{tpu_custom_call.1} parent=11 // pred_region
          _
        $region60: #{tpu_custom_call.1} parent=11 // pred_fallthru
          _
        // Predicated region
        $region61: #{tpu_custom_call.1} parent=11 // pred_check
          %p589 = pneg %p342
        $region62: #{tpu_custom_call.1} parent=11 // pred_check_branch
          %591 = sbr.rel (%p589) target = $region64
        $region63: #{tpu_custom_call.1} parent=11 // pred_region
          _
        $region64: #{tpu_custom_call.1} parent=11 // pred_fallthru
          _
        // Predicated region
        $region65: #{tpu_custom_call.1} parent=11 // pred_check
          %p592 = pneg %p363
        $region66: #{tpu_custom_call.1} parent=11 // pred_check_branch
          %594 = sbr.rel (%p592) target = $region68
        $region67: #{tpu_custom_call.1} parent=11 // pred_region
          _
        $region68: #{tpu_custom_call.1} parent=11 // pred_fallthru
          _
        // Predicated region
        $region69: #{tpu_custom_call.1} parent=11 // pred_check
          %p595 = pneg %p384
        $region70: #{tpu_custom_call.1} parent=11 // pred_check_branch
          %597 = sbr.rel (%p595) target = $region72
        $region71: #{tpu_custom_call.1} parent=11 // pred_region
          %s599 = ssub.s32 2048, 2048
          %600 = vsyncadd [#allocation20], %s599
          %s601 = sshll.u32 [#allocation19], 4
          %s602 = int_to_ptr.vmem [resolvable:$true] %s601
          %607 = dma.hbm_to_vmem [thread:$0]  %s17, 2048, %s602, [#allocation20], 128, 128, 8
        $region72: #{tpu_custom_call.1} parent=11 // pred_fallthru
          _
        // Predicated region
        $region73: #{tpu_custom_call.1} parent=11 // pred_check
          %p608 = pneg %p405
        $region74: #{tpu_custom_call.1} parent=11 // pred_check_branch
          %610 = sbr.rel (%p608) target = $region76
        $region75: #{tpu_custom_call.1} parent=11 // pred_region
          _
        $region76: #{tpu_custom_call.1} parent=11 // pred_fallthru
          _
        // Predicated region
        $region77: #{tpu_custom_call.1} parent=11 // pred_check
          %p611 = pneg %p426
        $region78: #{tpu_custom_call.1} parent=11 // pred_check_branch
          %613 = sbr.rel (%p611) target = $region80
        $region79: #{tpu_custom_call.1} parent=11 // pred_region
          %s615 = ssub.s32 2048, 2048
          %616 = vsyncadd [#allocation20], %s615
          %s617 = sshll.u32 [#allocation21], 4
          %s618 = int_to_ptr.vmem [resolvable:$true] %s617
          %623 = dma.hbm_to_vmem [thread:$0]  %s19, 2048, %s618, [#allocation20], 128, 128, 8
        $region80: #{tpu_custom_call.1} parent=11 // pred_fallthru
          _
        // Predicated region
        $region81: #{tpu_custom_call.1} parent=11 // pred_check
          %p624 = pneg %p447
        $region82: #{tpu_custom_call.1} parent=11 // pred_check_branch
          %626 = sbr.rel (%p624) target = $region84
        $region83: #{tpu_custom_call.1} parent=11 // pred_region
          _
        $region84: #{tpu_custom_call.1} parent=11 // pred_fallthru
          _
        // Predicated region
        $region85: #{tpu_custom_call.1} parent=11 // pred_check
          %p627 = pneg %p468
        $region86: #{tpu_custom_call.1} parent=11 // pred_check_branch
          %629 = sbr.rel (%p627) target = $region88
        $region87: #{tpu_custom_call.1} parent=11 // pred_region
          _
        $region88: #{tpu_custom_call.1} parent=11 // pred_fallthru
          _
        // Predicated region
        $region89: #{tpu_custom_call.1} parent=11 // pred_check
          %p630 = pneg %p489
        $region90: #{tpu_custom_call.1} parent=11 // pred_check_branch
          %632 = sbr.rel (%p630) target = $region92
        $region91: #{tpu_custom_call.1} parent=11 // pred_region
          _
        $region92: #{tpu_custom_call.1} parent=11 // pred_fallthru
          _
      $region12: #{tpu_custom_call.1} parent=5 // pred_fallthru
        _
      %p633 = scmp.lt.s32.totalorder %s43, 2
      // Predicated region
      $region93: #{tpu_custom_call.1} parent=5 // pred_check
        %p634 = pneg %p633
      $region94: #{tpu_custom_call.1} parent=5 // pred_check_branch
        %636 = sbr.rel (%p634) target = $region96
      $region95: #{tpu_custom_call.1} parent=5 // pred_region
        // Predicated region
        $region97: #{tpu_custom_call.1} parent=95 // pred_check
          %p637 = pneg %p84
        $region98: #{tpu_custom_call.1} parent=95 // pred_check_branch
          %639 = sbr.rel (%p637) target = $region100
        $region99: #{tpu_custom_call.1} parent=95 // pred_region
          %p640 = scmp.lt.s32.totalorder %s43, 1
          %s641 = scalar_select %p640, %s43, 1
          %s642 = smul.addr %s641, 8
          %s643 = scalar_lea.vmem %s3, %s642
        $region100: #{tpu_custom_call.1} parent=95 // pred_fallthru
          _
      $region96: #{tpu_custom_call.1} parent=5 // pred_fallthru
        _
      %p644 = scmp.le.s32.totalorder 1, %s43
      %p645 = scmp.lt.s32.totalorder %s43, 3
      %p646 = pnand %p644, %p645
      %p647 = pneg %p646
      // Predicated region
      $region101: #{tpu_custom_call.1} parent=5 // pred_check
        _
      $region102: #{tpu_custom_call.1} parent=5 // pred_check_branch
        %649 = sbr.rel (%p646) target = $region104
      $region103: #{tpu_custom_call.1} parent=5 // pred_region
        %s650 = ssub.s32 %s43, 1
        // Predicated region
        $region105: #{tpu_custom_call.1} parent=103 // pred_check
          %p651 = pneg %p174
        $region106: #{tpu_custom_call.1} parent=103 // pred_check_branch
          %653 = sbr.rel (%p651) target = $region108
        $region107: #{tpu_custom_call.1} parent=103 // pred_region
          %654 = dma.done [#allocation14], 256
        $region108: #{tpu_custom_call.1} parent=103 // pred_fallthru
          _
        // Predicated region
        $region109: #{tpu_custom_call.1} parent=103 // pred_check
          %p655 = pneg %p195
        $region110: #{tpu_custom_call.1} parent=103 // pred_check_branch
          %657 = sbr.rel (%p655) target = $region112
        $region111: #{tpu_custom_call.1} parent=103 // pred_region
          %658 = dma.done [#allocation17], 16
        $region112: #{tpu_custom_call.1} parent=103 // pred_fallthru
          _
        // Predicated region
        $region113: #{tpu_custom_call.1} parent=103 // pred_check
          %p659 = pneg %p216
        $region114: #{tpu_custom_call.1} parent=103 // pred_check_branch
          %661 = sbr.rel (%p659) target = $region116
        $region115: #{tpu_custom_call.1} parent=103 // pred_region
          %662 = dma.done [#allocation17], 256
        $region116: #{tpu_custom_call.1} parent=103 // pred_fallthru
          _
        // Predicated region
        $region117: #{tpu_custom_call.1} parent=103 // pred_check
          %p663 = pneg %p384
        $region118: #{tpu_custom_call.1} parent=103 // pred_check_branch
          %665 = sbr.rel (%p663) target = $region120
        $region119: #{tpu_custom_call.1} parent=103 // pred_region
          %666 = dma.done [#allocation20], 2048
        $region120: #{tpu_custom_call.1} parent=103 // pred_fallthru
          _
        // Predicated region
        $region121: #{tpu_custom_call.1} parent=103 // pred_check
          %p667 = pneg %p426
        $region122: #{tpu_custom_call.1} parent=103 // pred_check_branch
          %669 = sbr.rel (%p667) target = $region124
        $region123: #{tpu_custom_call.1} parent=103 // pred_region
          %670 = dma.done [#allocation20], 2048
        $region124: #{tpu_custom_call.1} parent=103 // pred_fallthru
          _
        %p671 = pneg %p64
        %p672 = pneg %p61
        %p673 = scmp.lt.s32.totalorder %s48, 1
        %s674 = scalar_select %p673, %s48, 1
        %s675 = smul.addr %s674, 8
        %s676 = scalar_lea.vmem %s3, %s675
        %p677 = pneg %p90
        %p678 = pneg %p87
        %p679 = pneg %p111
        %p680 = pneg %p108
        %p681 = pneg %p132
        %p682 = pneg %p129
        %p683 = pneg %p153
        %p684 = pneg %p150
        %p685 = pneg %p174
        %p686 = pneg %p171
        %p687 = pneg %p195
        %p688 = pneg %p192
        %p689 = pneg %p216
        %p690 = pneg %p213
        %p691 = pneg %p237
        %p692 = pneg %p234
        %p693 = pneg %p258
        %p694 = pneg %p255
        %p695 = pneg %p279
        %p696 = pneg %p276
        %p697 = pneg %p300
        %p698 = pneg %p297
        %p699 = pneg %p321
        %p700 = pneg %p318
        %p701 = pneg %p342
        %p702 = pneg %p339
        %p703 = pneg %p363
        %p704 = pneg %p360
        %p705 = pneg %p384
        %p706 = pneg %p381
        %p707 = pneg %p405
        %p708 = pneg %p402
        %p709 = pneg %p426
        %p710 = pneg %p423
        %p711 = pneg %p447
        %p712 = pneg %p444
        %p713 = pneg %p468
        %p714 = pneg %p465
        %p715 = pneg %p489
        %p716 = pneg %p486
        %p717 = pneg %p510
        %p718 = pneg %p507
        %p719 = scmp.lt.s32.totalorder %s48, 1
        %s720 = scalar_select %p719, %s48, 1
        %s721 = smul.addr %s720, 8
        %s722 = scalar_lea.vmem %s3, %s721
        %s723 = smul.u32 %s48, 8
        %p724 = scmp.eq.s32.totalorder %s48, 0
        // Predicated region
        $region125: #{tpu_custom_call.1} parent=103 // pred_check
          %p725 = pneg %p724
        $region126: #{tpu_custom_call.1} parent=103 // pred_check_branch
          %727 = sbr.rel (%p725) target = $region128
        $region127: #{tpu_custom_call.1} parent=103 // pred_region
          %v728 = vld [vmem:[%s2] sm:$0xff]
          %v729 = vld [vmem:[%s5] sm:$0xff]
          %v730 = vld [vmem:[%s5 + $0x8] sm:$0xff]
          %v731 = vld [vmem:[%s6] sm:$0x1]
          %v733 = vlaneseq
          %v734 = vshrl.u32 %v733, 7
          %v735 = vsub.s32 0, %v734
          %v736 = vrot.slane %v731, %v735
          %vm738 = vcmask 130048
          %v740 = vsel %vm738, %v728, 0
          %742 = vmatprep.subr.mxu0 0.0
          %743 = vmatpush1.msra.mxu0 %v729
          %744 = vmatprep.subr.mxu0 0.0
          %745 = vmatpush1.msra.mxu0 %v730
          %746 = vmatprep.subr.mxu0 0.0
          %747 = vmatpush1.msra.mxu0 0.0
          %748 = vmatprep.subr.mxu0 0.0
          %749 = vmatpush1.msra.mxu0 0.0
          %750 = vmatprep.subr.mxu0 0.0
          %751 = vmatpush1.msra.mxu0 0.0
          %752 = vmatprep.subr.mxu0 0.0
          %753 = vmatpush1.msra.mxu0 0.0
          %754 = vmatprep.subr.mxu0 0.0
          %755 = vmatpush1.msra.mxu0 0.0
          %756 = vmatprep.subr.mxu0 0.0
          %757 = vmatpush1.msra.mxu0 0.0
          %758 = vmatprep.subr.mxu0 0.0
          %759 = vmatpush1.msra.mxu0 0.0
          %760 = vmatprep.subr.mxu0 0.0
          %761 = vmatpush1.msra.mxu0 0.0
          %762 = vmatprep.subr.mxu0 0.0
          %763 = vmatpush1.msra.mxu0 0.0
          %764 = vmatprep.subr.mxu0 0.0
          %765 = vmatpush1.msra.mxu0 0.0
          %766 = vmatprep.subr.mxu0 0.0
          %767 = vmatpush1.msra.mxu0 0.0
          %768 = vmatprep.subr.mxu0 0.0
          %769 = vmatpush1.msra.mxu0 0.0
          %770 = vmatprep.subr.mxu0 0.0
          %771 = vmatpush1.msra.mxu0 0.0
          %772 = vmatprep.subr.mxu0 0.0
          %773 = vmatpush1.msra.mxu0 0.0
          %774 = vmatprep.subr.mxu0 0.0
          %775 = vmatpush1.msra.mxu0 0.0
          %776 = vmatprep.subr.mxu0 0.0
          %777 = vmatpush1.msra.mxu0 0.0
          %778 = vmatprep.subr.mxu0 0.0
          %779 = vmatpush1.msra.mxu0 0.0
          %780 = vmatprep.subr.mxu0 0.0
          %781 = vmatpush1.msra.mxu0 0.0
          %782 = vmatprep.subr.mxu0 0.0
          %783 = vmatpush1.msra.mxu0 0.0
          %784 = vmatprep.subr.mxu0 0.0
          %785 = vmatpush1.msra.mxu0 0.0
          %786 = vmatprep.subr.mxu0 0.0
          %787 = vmatpush1.msra.mxu0 0.0
          %788 = vmatprep.subr.mxu0 0.0
          %789 = vmatpush1.msra.mxu0 0.0
          %790 = vmatprep.subr.mxu0 0.0
          %791 = vmatpush1.msra.mxu0 0.0
          %792 = vmatprep.subr.mxu0 0.0
          %793 = vmatpush1.msra.mxu0 0.0
          %794 = vmatprep.subr.mxu0 0.0
          %795 = vmatpush1.msra.mxu0 0.0
          %796 = vmatprep.subr.mxu0 0.0
          %797 = vmatpush1.msra.mxu0 0.0
          %798 = vmatprep.subr.mxu0 0.0
          %799 = vmatpush1.msra.mxu0 0.0
          %800 = vmatprep.subr.mxu0 0.0
          %801 = vmatpush1.msra.mxu0 0.0
          %802 = vmatprep.subr.mxu0 0.0
          %803 = vmatpush1.msra.mxu0 0.0
          %804 = vmatprep.subr.mxu0 0.0
          %805 = vmatpush1.msra.mxu0 0.0
          %806 = vmatprep.mubr.f32.mxu0 0.0
          %807 = vmatmul.mubr.f32.gmra.mrb[0].mxu0 %v740
          %v808 = vpop.f32.mrb[0].mxu0
          %v809 = vadd.f32 %v736, %v808
          %v810 = vpop.f32.mrb[0].mxu0
          %811 = vdwg.mxu0
          %812 = vst [vmem:[#allocation2] sm:$0xff] %v809
          %v813 = vld [vmem:[#allocation13] sm:$0xff]
          %v814 = vld [vmem:[#allocation13 + $0x8] sm:$0xff]
          %v815 = vld [vmem:[#allocation16] sm:$0x1]
          %v817 = vlaneseq
          %v818 = vshrl.u32 %v817, 7
          %v819 = vsub.s32 0, %v818
          %v820 = vrot.slane %v815, %v819
          %822 = vmatprep.subr.mxu0 0.0
          %823 = vmatpush1.msra.mxu0 %v813
          %824 = vmatprep.subr.mxu0 0.0
          %825 = vmatpush1.msra.mxu0 %v814
          %826 = vmatprep.subr.mxu0 0.0
          %827 = vmatpush1.msra.mxu0 0.0
          %828 = vmatprep.subr.mxu0 0.0
          %829 = vmatpush1.msra.mxu0 0.0
          %830 = vmatprep.subr.mxu0 0.0
          %831 = vmatpush1.msra.mxu0 0.0
          %832 = vmatprep.subr.mxu0 0.0
          %833 = vmatpush1.msra.mxu0 0.0
          %834 = vmatprep.subr.mxu0 0.0
          %835 = vmatpush1.msra.mxu0 0.0
          %836 = vmatprep.subr.mxu0 0.0
          %837 = vmatpush1.msra.mxu0 0.0
          %838 = vmatprep.subr.mxu0 0.0
          %839 = vmatpush1.msra.mxu0 0.0
          %840 = vmatprep.subr.mxu0 0.0
          %841 = vmatpush1.msra.mxu0 0.0
          %842 = vmatprep.subr.mxu0 0.0
          %843 = vmatpush1.msra.mxu0 0.0
          %844 = vmatprep.subr.mxu0 0.0
          %845 = vmatpush1.msra.mxu0 0.0
          %846 = vmatprep.subr.mxu0 0.0
          %847 = vmatpush1.msra.mxu0 0.0
          %848 = vmatprep.subr.mxu0 0.0
          %849 = vmatpush1.msra.mxu0 0.0
          %850 = vmatprep.subr.mxu0 0.0
          %851 = vmatpush1.msra.mxu0 0.0
          %852 = vmatprep.subr.mxu0 0.0
          %853 = vmatpush1.msra.mxu0 0.0
          %854 = vmatprep.subr.mxu0 0.0
          %855 = vmatpush1.msra.mxu0 0.0
          %856 = vmatprep.subr.mxu0 0.0
          %857 = vmatpush1.msra.mxu0 0.0
          %858 = vmatprep.subr.mxu0 0.0
          %859 = vmatpush1.msra.mxu0 0.0
          %860 = vmatprep.subr.mxu0 0.0
          %861 = vmatpush1.msra.mxu0 0.0
          %862 = vmatprep.subr.mxu0 0.0
          %863 = vmatpush1.msra.mxu0 0.0
          %864 = vmatprep.subr.mxu0 0.0
          %865 = vmatpush1.msra.mxu0 0.0
          %866 = vmatprep.subr.mxu0 0.0
          %867 = vmatpush1.msra.mxu0 0.0
          %868 = vmatprep.subr.mxu0 0.0
          %869 = vmatpush1.msra.mxu0 0.0
          %870 = vmatprep.subr.mxu0 0.0
          %871 = vmatpush1.msra.mxu0 0.0
          %872 = vmatprep.subr.mxu0 0.0
          %873 = vmatpush1.msra.mxu0 0.0
          %874 = vmatprep.subr.mxu0 0.0
          %875 = vmatpush1.msra.mxu0 0.0
          %876 = vmatprep.subr.mxu0 0.0
          %877 = vmatpush1.msra.mxu0 0.0
          %878 = vmatprep.subr.mxu0 0.0
          %879 = vmatpush1.msra.mxu0 0.0
          %880 = vmatprep.subr.mxu0 0.0
          %881 = vmatpush1.msra.mxu0 0.0
          %882 = vmatprep.subr.mxu0 0.0
          %883 = vmatpush1.msra.mxu0 0.0
          %884 = vmatprep.subr.mxu0 0.0
          %885 = vmatpush1.msra.mxu0 0.0
          %886 = vmatprep.mubr.f32.mxu0 0.0
          %887 = vmatmul.mubr.f32.gmra.mrb[0].mxu0 %v740
          %v888 = vpop.f32.mrb[0].mxu0
          %v889 = vadd.f32 %v820, %v888
          %v890 = vpop.f32.mrb[0].mxu0
          %891 = vdwg.mxu0
          %892 = vst [vmem:[#allocation3] sm:$0xff] %v889
          %v893 = vld [vmem:[#allocation18] sm:$0xff]
          %v894 = vld [vmem:[#allocation18 + $0x8] sm:$0xff]
          %v895 = vld [vmem:[%s10] sm:$0x1]
          %v897 = vlaneseq
          %v898 = vshrl.u32 %v897, 7
          %v899 = vsub.s32 0, %v898
          %v900 = vrot.slane %v895, %v899
          %902 = vmatprep.subr.mxu0 0.0
          %903 = vmatpush1.msra.mxu0 %v893
          %904 = vmatprep.subr.mxu0 0.0
          %905 = vmatpush1.msra.mxu0 %v894
          %906 = vmatprep.subr.mxu0 0.0
          %907 = vmatpush1.msra.mxu0 0.0
          %908 = vmatprep.subr.mxu0 0.0
          %909 = vmatpush1.msra.mxu0 0.0
          %910 = vmatprep.subr.mxu0 0.0
          %911 = vmatpush1.msra.mxu0 0.0
          %912 = vmatprep.subr.mxu0 0.0
          %913 = vmatpush1.msra.mxu0 0.0
          %914 = vmatprep.subr.mxu0 0.0
          %915 = vmatpush1.msra.mxu0 0.0
          %916 = vmatprep.subr.mxu0 0.0
          %917 = vmatpush1.msra.mxu0 0.0
          %918 = vmatprep.subr.mxu0 0.0
          %919 = vmatpush1.msra.mxu0 0.0
          %920 = vmatprep.subr.mxu0 0.0
          %921 = vmatpush1.msra.mxu0 0.0
          %922 = vmatprep.subr.mxu0 0.0
          %923 = vmatpush1.msra.mxu0 0.0
          %924 = vmatprep.subr.mxu0 0.0
          %925 = vmatpush1.msra.mxu0 0.0
          %926 = vmatprep.subr.mxu0 0.0
          %927 = vmatpush1.msra.mxu0 0.0
          %928 = vmatprep.subr.mxu0 0.0
          %929 = vmatpush1.msra.mxu0 0.0
          %930 = vmatprep.subr.mxu0 0.0
          %931 = vmatpush1.msra.mxu0 0.0
          %932 = vmatprep.subr.mxu0 0.0
          %933 = vmatpush1.msra.mxu0 0.0
          %934 = vmatprep.subr.mxu0 0.0
          %935 = vmatpush1.msra.mxu0 0.0
          %936 = vmatprep.subr.mxu0 0.0
          %937 = vmatpush1.msra.mxu0 0.0
          %938 = vmatprep.subr.mxu0 0.0
          %939 = vmatpush1.msra.mxu0 0.0
          %940 = vmatprep.subr.mxu0 0.0
          %941 = vmatpush1.msra.mxu0 0.0
          %942 = vmatprep.subr.mxu0 0.0
          %943 = vmatpush1.msra.mxu0 0.0
          %944 = vmatprep.subr.mxu0 0.0
          %945 = vmatpush1.msra.mxu0 0.0
          %946 = vmatprep.subr.mxu0 0.0
          %947 = vmatpush1.msra.mxu0 0.0
          %948 = vmatprep.subr.mxu0 0.0
          %949 = vmatpush1.msra.mxu0 0.0
          %950 = vmatprep.subr.mxu0 0.0
          %951 = vmatpush1.msra.mxu0 0.0
          %952 = vmatprep.subr.mxu0 0.0
          %953 = vmatpush1.msra.mxu0 0.0
          %954 = vmatprep.subr.mxu0 0.0
          %955 = vmatpush1.msra.mxu0 0.0
          %956 = vmatprep.subr.mxu0 0.0
          %957 = vmatpush1.msra.mxu0 0.0
          %958 = vmatprep.subr.mxu0 0.0
          %959 = vmatpush1.msra.mxu0 0.0
          %960 = vmatprep.subr.mxu0 0.0
          %961 = vmatpush1.msra.mxu0 0.0
          %962 = vmatprep.subr.mxu0 0.0
          %963 = vmatpush1.msra.mxu0 0.0
          %964 = vmatprep.subr.mxu0 0.0
          %965 = vmatpush1.msra.mxu0 0.0
          %966 = vmatprep.mubr.f32.mxu0 0.0
          %967 = vmatmul.mubr.f32.gmra.mrb[0].mxu0 %v740
          %v968 = vpop.f32.mrb[0].mxu0
          %v969 = vadd.f32 %v900, %v968
          %v970 = vpop.f32.mrb[0].mxu0
          %971 = vdwg.mxu0
          %972 = vst [vmem:[#allocation4] sm:$0xff] %v969
          %973 = vst [vmem:[#allocation5] sm:$0xff] 0.0
        $region128: #{tpu_custom_call.1} parent=103 // pred_fallthru
          _
        %v974 = vld [vmem:[%s722] sm:$0xff]
        %v975 = vld [vmem:[%s11] sm:$0xf]
        %v976 = vld [vmem:[%s12] sm:$0x1]
        %v978 = vlaneseq
        %v979 = vshrl.u32 %v978, 7
        %v980 = vsub.s32 0, %v979
        %v981 = vrot.slane %v976, %v980
        %vm983 = vcmask 31744
        %v985 = vsel %vm983, %v974, 0
        %vm987 = vcmask 1043456
        %v989 = vsel %vm987, %v975, 0
        %991 = vmatprep.subr.mxu0 0.0
        %992 = vmatpush1.msra.mxu0 %v989
        %993 = vmatprep.subr.mxu0 0.0
        %994 = vmatpush1.msra.mxu0 0.0
        %995 = vmatprep.subr.mxu0 0.0
        %996 = vmatpush1.msra.mxu0 0.0
        %997 = vmatprep.subr.mxu0 0.0
        %998 = vmatpush1.msra.mxu0 0.0
        %999 = vmatprep.subr.mxu0 0.0
        %1000 = vmatpush1.msra.mxu0 0.0
        %1001 = vmatprep.subr.mxu0 0.0
        %1002 = vmatpush1.msra.mxu0 0.0
        %1003 = vmatprep.subr.mxu0 0.0
        %1004 = vmatpush1.msra.mxu0 0.0
        %1005 = vmatprep.subr.mxu0 0.0
        %1006 = vmatpush1.msra.mxu0 0.0
        %1007 = vmatprep.subr.mxu0 0.0
        %1008 = vmatpush1.msra.mxu0 0.0
        %1009 = vmatprep.subr.mxu0 0.0
        %1010 = vmatpush1.msra.mxu0 0.0
        %1011 = vmatprep.subr.mxu0 0.0
        %1012 = vmatpush1.msra.mxu0 0.0
        %1013 = vmatprep.subr.mxu0 0.0
        %1014 = vmatpush1.msra.mxu0 0.0
        %1015 = vmatprep.subr.mxu0 0.0
        %1016 = vmatpush1.msra.mxu0 0.0
        %1017 = vmatprep.subr.mxu0 0.0
        %1018 = vmatpush1.msra.mxu0 0.0
        %1019 = vmatprep.subr.mxu0 0.0
        %1020 = vmatpush1.msra.mxu0 0.0
        %1021 = vmatprep.subr.mxu0 0.0
        %1022 = vmatpush1.msra.mxu0 0.0
        %1023 = vmatprep.subr.mxu0 0.0
        %1024 = vmatpush1.msra.mxu0 0.0
        %1025 = vmatprep.subr.mxu0 0.0
        %1026 = vmatpush1.msra.mxu0 0.0
        %1027 = vmatprep.subr.mxu0 0.0
        %1028 = vmatpush1.msra.mxu0 0.0
        %1029 = vmatprep.subr.mxu0 0.0
        %1030 = vmatpush1.msra.mxu0 0.0
        %1031 = vmatprep.subr.mxu0 0.0
        %1032 = vmatpush1.msra.mxu0 0.0
        %1033 = vmatprep.subr.mxu0 0.0
        %1034 = vmatpush1.msra.mxu0 0.0
        %1035 = vmatprep.subr.mxu0 0.0
        %1036 = vmatpush1.msra.mxu0 0.0
        %1037 = vmatprep.subr.mxu0 0.0
        %1038 = vmatpush1.msra.mxu0 0.0
        %1039 = vmatprep.subr.mxu0 0.0
        %1040 = vmatpush1.msra.mxu0 0.0
        %1041 = vmatprep.subr.mxu0 0.0
        %1042 = vmatpush1.msra.mxu0 0.0
        %1043 = vmatprep.subr.mxu0 0.0
        %1044 = vmatpush1.msra.mxu0 0.0
        %1045 = vmatprep.subr.mxu0 0.0
        %1046 = vmatpush1.msra.mxu0 0.0
        %1047 = vmatprep.subr.mxu0 0.0
        %1048 = vmatpush1.msra.mxu0 0.0
        %1049 = vmatprep.subr.mxu0 0.0
        %1050 = vmatpush1.msra.mxu0 0.0
        %1051 = vmatprep.subr.mxu0 0.0
        %1052 = vmatpush1.msra.mxu0 0.0
        %1053 = vmatprep.subr.mxu0 0.0
        %1054 = vmatpush1.msra.mxu0 0.0
        %1055 = vmatprep.mubr.f32.mxu0 0.0
        %1056 = vmatmul.mubr.f32.gmra.mrb[0].mxu0 %v985
        %v1057 = vpop.f32.mrb[0].mxu0
        %v1058 = vadd.f32 %v981, %v1057
        %v1059 = vpop.f32.mrb[0].mxu0
        %1060 = vdwg.mxu0
        %s1061 = sld [smem:[#allocation11 + %s723]]
        %s1062 = sld [smem:[#allocation12 + %s723]]
        %s1063 = scalar_lea.vmem [#allocation2], %s1061
        %v1064 = vld [vmem:[%s1063] sm:$0x1]
        %1065 = vst [vmem:[#allocation6] sm:$0x1] %v1064
        %s1066 = scalar_lea.vmem [#allocation3], %s1062
        %v1067 = vld [vmem:[%s1066] sm:$0x1]
        %1068 = vst [vmem:[#allocation7] sm:$0x1] %v1067
        %s1069 = scalar_lea.vmem [#allocation4], %s1062
        %v1070 = vld [vmem:[%s1069] sm:$0x1]
        %1071 = vst [vmem:[#allocation8] sm:$0x1] %v1070
        %s1072 = sadd.s32 %s723, 1
        %s1073 = sld [smem:[#allocation11 + %s1072]]
        %s1074 = sld [smem:[#allocation12 + %s1072]]
        %s1075 = scalar_lea.vmem [#allocation2], %s1073
        %v1076 = vld [vmem:[%s1075] sm:$0x1]
        %1077 = vst [vmem:[#allocation6 + $0x1] sm:$0x1] %v1076
        %s1078 = scalar_lea.vmem [#allocation3], %s1074
        %v1079 = vld [vmem:[%s1078] sm:$0x1]
        %1080 = vst [vmem:[#allocation7 + $0x1] sm:$0x1] %v1079
        %s1081 = scalar_lea.vmem [#allocation4], %s1074
        %v1082 = vld [vmem:[%s1081] sm:$0x1]
        %1083 = vst [vmem:[#allocation8 + $0x1] sm:$0x1] %v1082
        %s1084 = sadd.s32 %s723, 2
        %s1085 = sld [smem:[#allocation11 + %s1084]]
        %s1086 = sld [smem:[#allocation12 + %s1084]]
        %s1087 = scalar_lea.vmem [#allocation2], %s1085
        %v1088 = vld [vmem:[%s1087] sm:$0x1]
        %1089 = vst [vmem:[#allocation6 + $0x2] sm:$0x1] %v1088
        %s1090 = scalar_lea.vmem [#allocation3], %s1086
        %v1091 = vld [vmem:[%s1090] sm:$0x1]
        %1092 = vst [vmem:[#allocation7 + $0x2] sm:$0x1] %v1091
        %s1093 = scalar_lea.vmem [#allocation4], %s1086
        %v1094 = vld [vmem:[%s1093] sm:$0x1]
        %1095 = vst [vmem:[#allocation8 + $0x2] sm:$0x1] %v1094
        %s1096 = sadd.s32 %s723, 3
        %s1097 = sld [smem:[#allocation11 + %s1096]]
        %s1098 = sld [smem:[#allocation12 + %s1096]]
        %s1099 = scalar_lea.vmem [#allocation2], %s1097
        %v1100 = vld [vmem:[%s1099] sm:$0x1]
        %1101 = vst [vmem:[#allocation6 + $0x3] sm:$0x1] %v1100
        %s1102 = scalar_lea.vmem [#allocation3], %s1098
        %v1103 = vld [vmem:[%s1102] sm:$0x1]
        %1104 = vst [vmem:[#allocation7 + $0x3] sm:$0x1] %v1103
        %s1105 = scalar_lea.vmem [#allocation4], %s1098
        %v1106 = vld [vmem:[%s1105] sm:$0x1]
        %1107 = vst [vmem:[#allocation8 + $0x3] sm:$0x1] %v1106
        %s1108 = sadd.s32 %s723, 4
        %s1109 = sld [smem:[#allocation11 + %s1108]]
        %s1110 = sld [smem:[#allocation12 + %s1108]]
        %s1111 = scalar_lea.vmem [#allocation2], %s1109
        %v1112 = vld [vmem:[%s1111] sm:$0x1]
        %1113 = vst [vmem:[#allocation6 + $0x4] sm:$0x1] %v1112
        %s1114 = scalar_lea.vmem [#allocation3], %s1110
        %v1115 = vld [vmem:[%s1114] sm:$0x1]
        %1116 = vst [vmem:[#allocation7 + $0x4] sm:$0x1] %v1115
        %s1117 = scalar_lea.vmem [#allocation4], %s1110
        %v1118 = vld [vmem:[%s1117] sm:$0x1]
        %1119 = vst [vmem:[#allocation8 + $0x4] sm:$0x1] %v1118
        %s1120 = sadd.s32 %s723, 5
        %s1121 = sld [smem:[#allocation11 + %s1120]]
        %s1122 = sld [smem:[#allocation12 + %s1120]]
        %s1123 = scalar_lea.vmem [#allocation2], %s1121
        %v1124 = vld [vmem:[%s1123] sm:$0x1]
        %1125 = vst [vmem:[#allocation6 + $0x5] sm:$0x1] %v1124
        %s1126 = scalar_lea.vmem [#allocation3], %s1122
        %v1127 = vld [vmem:[%s1126] sm:$0x1]
        %1128 = vst [vmem:[#allocation7 + $0x5] sm:$0x1] %v1127
        %s1129 = scalar_lea.vmem [#allocation4], %s1122
        %v1130 = vld [vmem:[%s1129] sm:$0x1]
        %1131 = vst [vmem:[#allocation8 + $0x5] sm:$0x1] %v1130
        %s1132 = sadd.s32 %s723, 6
        %s1133 = sld [smem:[#allocation11 + %s1132]]
        %s1134 = sld [smem:[#allocation12 + %s1132]]
        %s1135 = scalar_lea.vmem [#allocation2], %s1133
        %v1136 = vld [vmem:[%s1135] sm:$0x1]
        %1137 = vst [vmem:[#allocation6 + $0x6] sm:$0x1] %v1136
        %s1138 = scalar_lea.vmem [#allocation3], %s1134
        %v1139 = vld [vmem:[%s1138] sm:$0x1]
        %1140 = vst [vmem:[#allocation7 + $0x6] sm:$0x1] %v1139
        %s1141 = scalar_lea.vmem [#allocation4], %s1134
        %v1142 = vld [vmem:[%s1141] sm:$0x1]
        %1143 = vst [vmem:[#allocation8 + $0x6] sm:$0x1] %v1142
        %s1144 = sadd.s32 %s723, 7
        %s1145 = sld [smem:[#allocation11 + %s1144]]
        %s1146 = sld [smem:[#allocation12 + %s1144]]
        %s1147 = scalar_lea.vmem [#allocation2], %s1145
        %v1148 = vld [vmem:[%s1147] sm:$0x1]
        %1149 = vst [vmem:[#allocation6 + $0x7] sm:$0x1] %v1148
        %s1150 = scalar_lea.vmem [#allocation3], %s1146
        %v1151 = vld [vmem:[%s1150] sm:$0x1]
        %1152 = vst [vmem:[#allocation7 + $0x7] sm:$0x1] %v1151
        %s1153 = scalar_lea.vmem [#allocation4], %s1146
        %v1154 = vld [vmem:[%s1153] sm:$0x1]
        %1155 = vst [vmem:[#allocation8 + $0x7] sm:$0x1] %v1154
        %v1156 = vld [vmem:[#allocation6] sm:$0xff]
        %v1157 = vld [vmem:[#allocation7] sm:$0xff]
        %v1158 = vmul.f32 %v1156, %v1157
        %v1159 = vmul.f32 %v1058, %v1058
        %v1160 = vadd.f32 %v1158, %v1159
        %vm1161 = vcmask 64512
        %v1162 = vsel %vm1161, %v1160, 0.0
        %1163 = vadd.xlane.f32.xlu0 %v1162
        %v1164 = vpop.xlane.xlu0 %1163
        %1166 = vrot.lane.b32.xlu0 %v1160, 120
        %v1167 = vpop.permute.xlu0 %1166
        %v1169 = vsel %vm1161, %v1167, 0.0
        %1170 = vadd.xlane.f32.xlu0 %v1169
        %v1171 = vpop.xlane.xlu0 %1170
        %1172 = vrot.lane.b32.xlu0 %v1160, 112
        %v1173 = vpop.permute.xlu0 %1172
        %v1175 = vsel %vm1161, %v1173, 0.0
        %1176 = vadd.xlane.f32.xlu0 %v1175
        %v1177 = vpop.xlane.xlu0 %1176
        %1178 = vrot.lane.b32.xlu0 %v1160, 104
        %v1179 = vpop.permute.xlu0 %1178
        %v1181 = vsel %vm1161, %v1179, 0.0
        %1182 = vadd.xlane.f32.xlu0 %v1181
        %v1183 = vpop.xlane.xlu0 %1182
        %vm1184 = vcmask 7168
        %v1185 = vsel %vm1184, %v1164, %v1171
        %vm1186 = vcmask 15360
        %v1187 = vsel %vm1186, %v1185, %v1177
        %vm1188 = vcmask 23552
        %v1189 = vsel %vm1188, %v1187, %v1183
        %v1190 = vmul.f32 %v1189, 0.35355338
        %v1191 = vsel %vm983, %v1190, -inf
        %1192 = vmax.xlane.f32.xlu0 %v1191
        %v1193 = vpop.xlane.xlu0 %1192
        %v1194 = vsub.f32 %v1190, %v1193
        %v1195 = vmul.f32 %v1194, 1.442695
        %v1196 = vpow.pop %v1195
        %v1197 = vsel %vm983, %v1196, 0.0
        %1198 = vadd.xlane.f32.xlu0 %v1197
        %v1199 = vpop.xlane.xlu0 %1198
        %v1200 = vrcp.pop %v1199
        %v1201 = vmul.f32 %v1196, %v1200
        %v1202 = vld [vmem:[#allocation8] sm:$0xff]
        %1204 = vset.pattern.permute.xlu0 0
        %1205 = vperm.xlu0 %1204, %v1201
        %v1206 = vpop.permute.xlu0 %1205
        %v1208 = vmul.f32 %v1206, %v1202
        %1209 = vset.pattern.permute.xlu0 1
        %1210 = vperm.xlu0 %1209, %v1201
        %v1211 = vpop.permute.xlu0 %1210
        %v1213 = vmul.f32 %v1211, %v1202
        %1214 = vset.pattern.permute.xlu0 2
        %1215 = vperm.xlu0 %1214, %v1201
        %v1216 = vpop.permute.xlu0 %1215
        %v1218 = vmul.f32 %v1216, %v1202
        %1219 = vset.pattern.permute.xlu0 3
        %1220 = vperm.xlu0 %1219, %v1201
        %v1221 = vpop.permute.xlu0 %1220
        %v1223 = vmul.f32 %v1221, %v1202
        %v1224 = vsel %vm1161, %v1208, %v1213
        %vm1225 = vcmask 130048
        %v1226 = vsel %vm1225, %v1224, %v1218
        %vm1227 = vcmask 195584
        %v1228 = vsel %vm1227, %v1226, %v1223
        %v1229 = vld [vmem:[%s13] sm:$0xff]
        %v1230 = vld [vmem:[%s13 + $0x8] sm:$0xff]
        %v1231 = vld [vmem:[%s13 + $0x10] sm:$0xff]
        %v1232 = vld [vmem:[%s13 + $0x18] sm:$0xff]
        %v1233 = vld [vmem:[%s14] sm:$0x1]
        %v1235 = vlaneseq
        %v1236 = vshrl.u32 %v1235, 7
        %v1237 = vsub.s32 0, %v1236
        %v1238 = vrot.slane %v1233, %v1237
        %vm1240 = vcmask 261120
        %v1242 = vsel %vm1240, %v1228, 0
        %1244 = vmatprep.subr.mxu0 0.0
        %1245 = vmatpush1.msra.mxu0 %v1229
        %1246 = vmatprep.subr.mxu0 0.0
        %1247 = vmatpush1.msra.mxu0 %v1230
        %1248 = vmatprep.subr.mxu0 0.0
        %1249 = vmatpush1.msra.mxu0 %v1231
        %1250 = vmatprep.subr.mxu0 0.0
        %1251 = vmatpush1.msra.mxu0 %v1232
        %1252 = vmatprep.subr.mxu0 0.0
        %1253 = vmatpush1.msra.mxu0 0.0
        %1254 = vmatprep.subr.mxu0 0.0
        %1255 = vmatpush1.msra.mxu0 0.0
        %1256 = vmatprep.subr.mxu0 0.0
        %1257 = vmatpush1.msra.mxu0 0.0
        %1258 = vmatprep.subr.mxu0 0.0
        %1259 = vmatpush1.msra.mxu0 0.0
        %1260 = vmatprep.subr.mxu0 0.0
        %1261 = vmatpush1.msra.mxu0 0.0
        %1262 = vmatprep.subr.mxu0 0.0
        %1263 = vmatpush1.msra.mxu0 0.0
        %1264 = vmatprep.subr.mxu0 0.0
        %1265 = vmatpush1.msra.mxu0 0.0
        %1266 = vmatprep.subr.mxu0 0.0
        %1267 = vmatpush1.msra.mxu0 0.0
        %1268 = vmatprep.subr.mxu0 0.0
        %1269 = vmatpush1.msra.mxu0 0.0
        %1270 = vmatprep.subr.mxu0 0.0
        %1271 = vmatpush1.msra.mxu0 0.0
        %1272 = vmatprep.subr.mxu0 0.0
        %1273 = vmatpush1.msra.mxu0 0.0
        %1274 = vmatprep.subr.mxu0 0.0
        %1275 = vmatpush1.msra.mxu0 0.0
        %1276 = vmatprep.subr.mxu0 0.0
        %1277 = vmatpush1.msra.mxu0 0.0
        %1278 = vmatprep.subr.mxu0 0.0
        %1279 = vmatpush1.msra.mxu0 0.0
        %1280 = vmatprep.subr.mxu0 0.0
        %1281 = vmatpush1.msra.mxu0 0.0
        %1282 = vmatprep.subr.mxu0 0.0
        %1283 = vmatpush1.msra.mxu0 0.0
        %1284 = vmatprep.subr.mxu0 0.0
        %1285 = vmatpush1.msra.mxu0 0.0
        %1286 = vmatprep.subr.mxu0 0.0
        %1287 = vmatpush1.msra.mxu0 0.0
        %1288 = vmatprep.subr.mxu0 0.0
        %1289 = vmatpush1.msra.mxu0 0.0
        %1290 = vmatprep.subr.mxu0 0.0
        %1291 = vmatpush1.msra.mxu0 0.0
        %1292 = vmatprep.subr.mxu0 0.0
        %1293 = vmatpush1.msra.mxu0 0.0
        %1294 = vmatprep.subr.mxu0 0.0
        %1295 = vmatpush1.msra.mxu0 0.0
        %1296 = vmatprep.subr.mxu0 0.0
        %1297 = vmatpush1.msra.mxu0 0.0
        %1298 = vmatprep.subr.mxu0 0.0
        %1299 = vmatpush1.msra.mxu0 0.0
        %1300 = vmatprep.subr.mxu0 0.0
        %1301 = vmatpush1.msra.mxu0 0.0
        %1302 = vmatprep.subr.mxu0 0.0
        %1303 = vmatpush1.msra.mxu0 0.0
        %1304 = vmatprep.subr.mxu0 0.0
        %1305 = vmatpush1.msra.mxu0 0.0
        %1306 = vmatprep.subr.mxu0 0.0
        %1307 = vmatpush1.msra.mxu0 0.0
        %1308 = vmatprep.mubr.f32.mxu0 0.0
        %1309 = vmatmul.mubr.f32.gmra.mrb[0].mxu0 %v1242
        %v1310 = vpop.f32.mrb[0].mxu0
        %v1311 = vadd.f32 %v1238, %v1310
        %v1312 = vpop.f32.mrb[0].mxu0
        %1313 = vdwg.mxu0
        %v1314 = vlaneseq
        %v1315 = vshrl.u32 %v1314, 7
        %v1316 = vstv %s723
        %v1317 = vadd.s32 %v1316, %v1315
        %vm1318 = vcmp.lt.s32.totalorder %v1317, 16
        %v1319 = vsel %vm1318, 1, 0
        %vm1320 = vcmp.eq.s32.totalorder %v1319, 1
        %v1321 = vsel %vm1320, %v1311, 0.0
        %1322 = vst [vmem:[#allocation9] sm:$0xff] %v1321
        %s1323 = sld [smem:[#allocation11 + %s723]]
        %s1324 = scalar_lea.vmem [#allocation5], %s1323
        %v1325 = vld [vmem:[%s1324] sm:$0x1]
        %v1326 = vld [vmem:[#allocation9] sm:$0x1]
        %v1327 = vadd.f32 %v1325, %v1326
        %1328 = vst [vmem:[%s1324] sm:$0x1] %v1327
        %s1329 = sld [smem:[#allocation11 + %s1072]]
        %s1330 = scalar_lea.vmem [#allocation5], %s1329
        %v1331 = vld [vmem:[%s1330] sm:$0x1]
        %v1332 = vld [vmem:[#allocation9 + $0x1] sm:$0x1]
        %v1333 = vadd.f32 %v1331, %v1332
        %1334 = vst [vmem:[%s1330] sm:$0x1] %v1333
        %s1335 = sld [smem:[#allocation11 + %s1084]]
        %s1336 = scalar_lea.vmem [#allocation5], %s1335
        %v1337 = vld [vmem:[%s1336] sm:$0x1]
        %v1338 = vld [vmem:[#allocation9 + $0x2] sm:$0x1]
        %v1339 = vadd.f32 %v1337, %v1338
        %1340 = vst [vmem:[%s1336] sm:$0x1] %v1339
        %s1341 = sld [smem:[#allocation11 + %s1096]]
        %s1342 = scalar_lea.vmem [#allocation5], %s1341
        %v1343 = vld [vmem:[%s1342] sm:$0x1]
        %v1344 = vld [vmem:[#allocation9 + $0x3] sm:$0x1]
        %v1345 = vadd.f32 %v1343, %v1344
        %1346 = vst [vmem:[%s1342] sm:$0x1] %v1345
        %s1347 = sld [smem:[#allocation11 + %s1108]]
        %s1348 = scalar_lea.vmem [#allocation5], %s1347
        %v1349 = vld [vmem:[%s1348] sm:$0x1]
        %v1350 = vld [vmem:[#allocation9 + $0x4] sm:$0x1]
        %v1351 = vadd.f32 %v1349, %v1350
        %1352 = vst [vmem:[%s1348] sm:$0x1] %v1351
        %s1353 = sld [smem:[#allocation11 + %s1120]]
        %s1354 = scalar_lea.vmem [#allocation5], %s1353
        %v1355 = vld [vmem:[%s1354] sm:$0x1]
        %v1356 = vld [vmem:[#allocation9 + $0x5] sm:$0x1]
        %v1357 = vadd.f32 %v1355, %v1356
        %1358 = vst [vmem:[%s1354] sm:$0x1] %v1357
        %s1359 = sld [smem:[#allocation11 + %s1132]]
        %s1360 = scalar_lea.vmem [#allocation5], %s1359
        %v1361 = vld [vmem:[%s1360] sm:$0x1]
        %v1362 = vld [vmem:[#allocation9 + $0x6] sm:$0x1]
        %v1363 = vadd.f32 %v1361, %v1362
        %1364 = vst [vmem:[%s1360] sm:$0x1] %v1363
        %s1365 = sld [smem:[#allocation11 + %s1144]]
        %s1366 = scalar_lea.vmem [#allocation5], %s1365
        %v1367 = vld [vmem:[%s1366] sm:$0x1]
        %v1368 = vld [vmem:[#allocation9 + $0x7] sm:$0x1]
        %v1369 = vadd.f32 %v1367, %v1368
        %1370 = vst [vmem:[%s1366] sm:$0x1] %v1369
        %p1371 = scmp.eq.s32.totalorder %s48, 1
        // Predicated region
        $region129: #{tpu_custom_call.1} parent=103 // pred_check
          %p1372 = pneg %p1371
        $region130: #{tpu_custom_call.1} parent=103 // pred_check_branch
          %1374 = sbr.rel (%p1372) target = $region132
        $region131: #{tpu_custom_call.1} parent=103 // pred_region
          %v1375 = vld [vmem:[%s4] sm:$0xff]
          %v1376 = vmax.f32 %v1375, 1.0
          %v1377 = vld [vmem:[#allocation5] sm:$0xff]
          %1379 = vset.pattern.permute.xlu0 0
          %1380 = vperm.xlu0 %1379, %v1376
          %v1381 = vpop.permute.xlu0 %1380
          %v1383 = vrcp.pop %v1381
          %v1384 = vmul.f32 %v1377, %v1383
          %1385 = vadd.xlane.f32.xlu0 %v1384
          %v1386 = vpop.xlane.xlu0 %1385
          %v1387 = vmul.f32 %v1386, 0.125
          %v1388 = vmul.f32 %v1384, %v1384
          %1389 = vadd.xlane.f32.xlu0 %v1388
          %v1390 = vpop.xlane.xlu0 %1389
          %v1391 = vmul.f32 %v1390, 0.125
          %v1392 = vmul.f32 %v1387, %v1387
          %v1393 = vsub.f32 %v1391, %v1392
          %v1394 = vsub.f32 %v1384, %v1387
          %v1395 = vadd.f32 %v1393, 1e-05
          %v1396 = vrsqrt.pop %v1395
          %v1397 = vmul.f32 %v1394, %v1396
          %v1398 = vld [vmem:[%s15] sm:$0x1]
          %v1400 = vlaneseq
          %v1401 = vshrl.u32 %v1400, 7
          %v1402 = vsub.s32 0, %v1401
          %v1403 = vrot.slane %v1398, %v1402
          %v1405 = vmul.f32 %v1397, %v1403
          %v1406 = vld [vmem:[%s16] sm:$0x1]
          %v1408 = vlaneseq
          %v1409 = vshrl.u32 %v1408, 7
          %v1410 = vsub.s32 0, %v1409
          %v1411 = vrot.slane %v1406, %v1410
          %v1413 = vadd.f32 %v1405, %v1411
          %v1414 = vld [vmem:[#allocation19] sm:$0xff]
          %v1415 = vld [vmem:[#allocation19 + $0x8] sm:$0xff]
          %v1416 = vld [vmem:[#allocation19 + $0x10] sm:$0xff]
          %v1417 = vld [vmem:[#allocation19 + $0x18] sm:$0xff]
          %v1418 = vld [vmem:[#allocation19 + $0x20] sm:$0xff]
          %v1419 = vld [vmem:[#allocation19 + $0x28] sm:$0xff]
          %v1420 = vld [vmem:[#allocation19 + $0x30] sm:$0xff]
          %v1421 = vld [vmem:[#allocation19 + $0x38] sm:$0xff]
          %v1422 = vld [vmem:[#allocation19 + $0x40] sm:$0xff]
          %v1423 = vld [vmem:[#allocation19 + $0x48] sm:$0xff]
          %v1424 = vld [vmem:[#allocation19 + $0x50] sm:$0xff]
          %v1425 = vld [vmem:[#allocation19 + $0x58] sm:$0xff]
          %v1426 = vld [vmem:[#allocation19 + $0x60] sm:$0xff]
          %v1427 = vld [vmem:[#allocation19 + $0x68] sm:$0xff]
          %v1428 = vld [vmem:[#allocation19 + $0x70] sm:$0xff]
          %v1429 = vld [vmem:[#allocation19 + $0x78] sm:$0xff]
          %v1430 = vld [vmem:[%s18] sm:$0x1]
          %v1432 = vlaneseq
          %v1433 = vshrl.u32 %v1432, 7
          %v1434 = vsub.s32 0, %v1433
          %v1435 = vrot.slane %v1430, %v1434
          %1437 = vmatprep.subr.mxu0 0.0
          %1438 = vmatpush1.msra.mxu0 %v1414
          %1439 = vmatprep.subr.mxu0 0.0
          %1440 = vmatpush1.msra.mxu0 %v1415
          %1441 = vmatprep.subr.mxu0 0.0
          %1442 = vmatpush1.msra.mxu0 %v1416
          %1443 = vmatprep.subr.mxu0 0.0
          %1444 = vmatpush1.msra.mxu0 %v1417
          %1445 = vmatprep.subr.mxu0 0.0
          %1446 = vmatpush1.msra.mxu0 %v1418
          %1447 = vmatprep.subr.mxu0 0.0
          %1448 = vmatpush1.msra.mxu0 %v1419
          %1449 = vmatprep.subr.mxu0 0.0
          %1450 = vmatpush1.msra.mxu0 %v1420
          %1451 = vmatprep.subr.mxu0 0.0
          %1452 = vmatpush1.msra.mxu0 %v1421
          %1453 = vmatprep.subr.mxu0 0.0
          %1454 = vmatpush1.msra.mxu0 %v1422
          %1455 = vmatprep.subr.mxu0 0.0
          %1456 = vmatpush1.msra.mxu0 %v1423
          %1457 = vmatprep.subr.mxu0 0.0
          %1458 = vmatpush1.msra.mxu0 %v1424
          %1459 = vmatprep.subr.mxu0 0.0
          %1460 = vmatpush1.msra.mxu0 %v1425
          %1461 = vmatprep.subr.mxu0 0.0
          %1462 = vmatpush1.msra.mxu0 %v1426
          %1463 = vmatprep.subr.mxu0 0.0
          %1464 = vmatpush1.msra.mxu0 %v1427
          %1465 = vmatprep.subr.mxu0 0.0
          %1466 = vmatpush1.msra.mxu0 %v1428
          %1467 = vmatprep.subr.mxu0 0.0
          %1468 = vmatpush1.msra.mxu0 %v1429
          %1469 = vmatprep.subr.mxu0 0.0
          %1470 = vmatpush1.msra.mxu0 0.0
          %1471 = vmatprep.subr.mxu0 0.0
          %1472 = vmatpush1.msra.mxu0 0.0
          %1473 = vmatprep.subr.mxu0 0.0
          %1474 = vmatpush1.msra.mxu0 0.0
          %1475 = vmatprep.subr.mxu0 0.0
          %1476 = vmatpush1.msra.mxu0 0.0
          %1477 = vmatprep.subr.mxu0 0.0
          %1478 = vmatpush1.msra.mxu0 0.0
          %1479 = vmatprep.subr.mxu0 0.0
          %1480 = vmatpush1.msra.mxu0 0.0
          %1481 = vmatprep.subr.mxu0 0.0
          %1482 = vmatpush1.msra.mxu0 0.0
          %1483 = vmatprep.subr.mxu0 0.0
          %1484 = vmatpush1.msra.mxu0 0.0
          %1485 = vmatprep.subr.mxu0 0.0
          %1486 = vmatpush1.msra.mxu0 0.0
          %1487 = vmatprep.subr.mxu0 0.0
          %1488 = vmatpush1.msra.mxu0 0.0
          %1489 = vmatprep.subr.mxu0 0.0
          %1490 = vmatpush1.msra.mxu0 0.0
          %1491 = vmatprep.subr.mxu0 0.0
          %1492 = vmatpush1.msra.mxu0 0.0
          %1493 = vmatprep.subr.mxu0 0.0
          %1494 = vmatpush1.msra.mxu0 0.0
          %1495 = vmatprep.subr.mxu0 0.0
          %1496 = vmatpush1.msra.mxu0 0.0
          %1497 = vmatprep.subr.mxu0 0.0
          %1498 = vmatpush1.msra.mxu0 0.0
          %1499 = vmatprep.subr.mxu0 0.0
          %1500 = vmatpush1.msra.mxu0 0.0
          %1501 = vmatprep.mubr.f32.mxu0 0.0
          %1502 = vmatmul.mubr.f32.gmra.mrb[0].mxu0 %v1413
          %v1503 = vpop.f32.mrb[0].mxu0
          %v1504 = vadd.f32 %v1435, %v1503
          %v1505 = vpop.f32.mrb[0].mxu0
          %1506 = vdwg.mxu0
          %v1507 = vmax.f32 %v1504, 0.0
          %v1508 = vld [vmem:[#allocation21] sm:$0xff]
          %v1509 = vld [vmem:[#allocation21 + $0x8] sm:$0xff]
          %v1510 = vld [vmem:[#allocation21 + $0x10] sm:$0xff]
          %v1511 = vld [vmem:[#allocation21 + $0x18] sm:$0xff]
          %v1512 = vld [vmem:[#allocation21 + $0x20] sm:$0xff]
          %v1513 = vld [vmem:[#allocation21 + $0x28] sm:$0xff]
          %v1514 = vld [vmem:[#allocation21 + $0x30] sm:$0xff]
          %v1515 = vld [vmem:[#allocation21 + $0x38] sm:$0xff]
          %v1516 = vld [vmem:[#allocation21 + $0x40] sm:$0xff]
          %v1517 = vld [vmem:[#allocation21 + $0x48] sm:$0xff]
          %v1518 = vld [vmem:[#allocation21 + $0x50] sm:$0xff]
          %v1519 = vld [vmem:[#allocation21 + $0x58] sm:$0xff]
          %v1520 = vld [vmem:[#allocation21 + $0x60] sm:$0xff]
          %v1521 = vld [vmem:[#allocation21 + $0x68] sm:$0xff]
          %v1522 = vld [vmem:[#allocation21 + $0x70] sm:$0xff]
          %v1523 = vld [vmem:[#allocation21 + $0x78] sm:$0xff]
          %v1524 = vld [vmem:[%s20] sm:$0x1]
          %v1526 = vlaneseq
          %v1527 = vshrl.u32 %v1526, 7
          %v1528 = vsub.s32 0, %v1527
          %v1529 = vrot.slane %v1524, %v1528
          %1531 = vmatprep.subr.mxu0 0.0
          %1532 = vmatpush1.msra.mxu0 %v1508
          %1533 = vmatprep.subr.mxu0 0.0
          %1534 = vmatpush1.msra.mxu0 %v1509
          %1535 = vmatprep.subr.mxu0 0.0
          %1536 = vmatpush1.msra.mxu0 %v1510
          %1537 = vmatprep.subr.mxu0 0.0
          %1538 = vmatpush1.msra.mxu0 %v1511
          %1539 = vmatprep.subr.mxu0 0.0
          %1540 = vmatpush1.msra.mxu0 %v1512
          %1541 = vmatprep.subr.mxu0 0.0
          %1542 = vmatpush1.msra.mxu0 %v1513
          %1543 = vmatprep.subr.mxu0 0.0
          %1544 = vmatpush1.msra.mxu0 %v1514
          %1545 = vmatprep.subr.mxu0 0.0
          %1546 = vmatpush1.msra.mxu0 %v1515
          %1547 = vmatprep.subr.mxu0 0.0
          %1548 = vmatpush1.msra.mxu0 %v1516
          %1549 = vmatprep.subr.mxu0 0.0
          %1550 = vmatpush1.msra.mxu0 %v1517
          %1551 = vmatprep.subr.mxu0 0.0
          %1552 = vmatpush1.msra.mxu0 %v1518
          %1553 = vmatprep.subr.mxu0 0.0
          %1554 = vmatpush1.msra.mxu0 %v1519
          %1555 = vmatprep.subr.mxu0 0.0
          %1556 = vmatpush1.msra.mxu0 %v1520
          %1557 = vmatprep.subr.mxu0 0.0
          %1558 = vmatpush1.msra.mxu0 %v1521
          %1559 = vmatprep.subr.mxu0 0.0
          %1560 = vmatpush1.msra.mxu0 %v1522
          %1561 = vmatprep.subr.mxu0 0.0
          %1562 = vmatpush1.msra.mxu0 %v1523
          %1563 = vmatprep.subr.mxu0 0.0
          %1564 = vmatpush1.msra.mxu0 0.0
          %1565 = vmatprep.subr.mxu0 0.0
          %1566 = vmatpush1.msra.mxu0 0.0
          %1567 = vmatprep.subr.mxu0 0.0
          %1568 = vmatpush1.msra.mxu0 0.0
          %1569 = vmatprep.subr.mxu0 0.0
          %1570 = vmatpush1.msra.mxu0 0.0
          %1571 = vmatprep.subr.mxu0 0.0
          %1572 = vmatpush1.msra.mxu0 0.0
          %1573 = vmatprep.subr.mxu0 0.0
          %1574 = vmatpush1.msra.mxu0 0.0
          %1575 = vmatprep.subr.mxu0 0.0
          %1576 = vmatpush1.msra.mxu0 0.0
          %1577 = vmatprep.subr.mxu0 0.0
          %1578 = vmatpush1.msra.mxu0 0.0
          %1579 = vmatprep.subr.mxu0 0.0
          %1580 = vmatpush1.msra.mxu0 0.0
          %1581 = vmatprep.subr.mxu0 0.0
          %1582 = vmatpush1.msra.mxu0 0.0
          %1583 = vmatprep.subr.mxu0 0.0
          %1584 = vmatpush1.msra.mxu0 0.0
          %1585 = vmatprep.subr.mxu0 0.0
          %1586 = vmatpush1.msra.mxu0 0.0
          %1587 = vmatprep.subr.mxu0 0.0
          %1588 = vmatpush1.msra.mxu0 0.0
          %1589 = vmatprep.subr.mxu0 0.0
          %1590 = vmatpush1.msra.mxu0 0.0
          %1591 = vmatprep.subr.mxu0 0.0
          %1592 = vmatpush1.msra.mxu0 0.0
          %1593 = vmatprep.subr.mxu0 0.0
          %1594 = vmatpush1.msra.mxu0 0.0
          %1595 = vmatprep.mubr.f32.mxu0 0.0
          %1596 = vmatmul.mubr.f32.gmra.mrb[0].mxu0 %v1507
          %v1597 = vpop.f32.mrb[0].mxu0
          %v1598 = vadd.f32 %v1529, %v1597
          %v1599 = vpop.f32.mrb[0].mxu0
          %1600 = vdwg.mxu0
          %1601 = vadd.xlane.f32.xlu0 %v1598
          %v1602 = vpop.xlane.xlu0 %1601
          %v1603 = vmul.f32 %v1602, 0.125
          %v1604 = vmul.f32 %v1598, %v1598
          %1605 = vadd.xlane.f32.xlu0 %v1604
          %v1606 = vpop.xlane.xlu0 %1605
          %v1607 = vmul.f32 %v1606, 0.125
          %v1608 = vmul.f32 %v1603, %v1603
          %v1609 = vsub.f32 %v1607, %v1608
          %v1610 = vsub.f32 %v1598, %v1603
          %v1611 = vadd.f32 %v1609, 1e-05
          %v1612 = vrsqrt.pop %v1611
          %v1613 = vmul.f32 %v1610, %v1612
          %v1614 = vld [vmem:[%s21] sm:$0x1]
          %v1616 = vlaneseq
          %v1617 = vshrl.u32 %v1616, 7
          %v1618 = vsub.s32 0, %v1617
          %v1619 = vrot.slane %v1614, %v1618
          %v1621 = vmul.f32 %v1613, %v1619
          %v1622 = vld [vmem:[%s22] sm:$0x1]
          %v1624 = vlaneseq
          %v1625 = vshrl.u32 %v1624, 7
          %v1626 = vsub.s32 0, %v1625
          %v1627 = vrot.slane %v1622, %v1626
          %v1629 = vadd.f32 %v1621, %v1627
          %1630 = vst [vmem:[#allocation22] sm:$0xff] %v1629
        $region132: #{tpu_custom_call.1} parent=103 // pred_fallthru
          _
        // Predicated region
        $region133: #{tpu_custom_call.1} parent=103 // pred_check
          %p1631 = pneg %p507
        $region134: #{tpu_custom_call.1} parent=103 // pred_check_branch
          %1633 = sbr.rel (%p1631) target = $region136
        $region135: #{tpu_custom_call.1} parent=103 // pred_region
          %s1635 = ssub.s32 128, 128
          %1636 = vsyncadd [#allocation15], %s1635
          %s1638 = sshll.u32 [#allocation22], 4
          %s1639 = int_to_ptr.vmem [resolvable:$true] %s1638
          %1641 = dma.vmem_to_hbm [thread:$0]  %s1639, 128, %s23, [#allocation15]
        $region136: #{tpu_custom_call.1} parent=103 // pred_fallthru
          _
        // Predicated region
        $region137: #{tpu_custom_call.1} parent=103 // pred_check
          %p1642 = pneg %p507
        $region138: #{tpu_custom_call.1} parent=103 // pred_check_branch
          %1644 = sbr.rel (%p1642) target = $region140
        $region139: #{tpu_custom_call.1} parent=103 // pred_region
          %1645 = dma.done [#allocation15], 128
        $region140: #{tpu_custom_call.1} parent=103 // pred_fallthru
          _
      $region104: #{tpu_custom_call.1} parent=5 // pred_fallthru
        _
      %p1646 = scmp.le.s32.totalorder 2, %s43
      // Predicated region
      $region141: #{tpu_custom_call.1} parent=5 // pred_check
        %p1647 = pneg %p1646
      $region142: #{tpu_custom_call.1} parent=5 // pred_check_branch
        %1649 = sbr.rel (%p1647) target = $region144
      $region143: #{tpu_custom_call.1} parent=5 // pred_region
        %s1650 = ssub.s32 %s43, 2
      $region144: #{tpu_custom_call.1} parent=5 // pred_fallthru
        _
    $region6: #{tpu_custom_call.1} parent=1 // loop_footer
      %s47 = sadd.s32 1, %s43
    $region7: #{tpu_custom_call.1} parent=1 // loop_footer_branch
      %42 = sbr.rel target = $region3
    $region8: #{tpu_custom_call.1} parent=1 // loop_exit
      _
    %1651 = vsyncpa [#allocation14], 1
    %s1652 = scalar_lea.sflag [#allocation14], 1
    %1653 = vsyncpa %s1652, 1
    %1654 = vsyncpa [#allocation17], 1
    %1655 = vsyncpa [#allocation20], 1
    %1656 = vsyncpa [#allocation15], 1
    %s1657 = scalar_lea.sflag [#allocation15], 1
    %1658 = vsyncpa %s1657, 1

</llo_original>
